<compile_context>
chip_gen: v5e
topology: v5e:2x2
jax: 0.10.0
libtpu: 0.0.40
codegen_flags: <defaults>
</compile_context>

<pallas_src>
import functools

import jax
import jax.numpy as jnp
from jax.experimental import pallas as pl
from jax.experimental.pallas import tpu as pltpu

NUM_ATOM_TYPE = 119
NUM_CHIRALITY_TAG = 3
NUM_BOND_TYPE = 5        # including aromatic and self-loop edge (type 4)
NUM_BOND_DIRECTION = 3

LANE = 128
SUBLANE = 8
EK = 128                 # padded width of the edge-attribute count matrix


def _round_up(x, m):
    return (x + m - 1) // m * m


def _pad2(a, rows, cols):
    return jnp.pad(a, ((0, rows - a.shape[0]), (0, cols - a.shape[1])))


def _vmem_limit_bytes():
    # Re-derive the scoped VMEM budget per chip: ~96 MiB on v5e/v6e (128 MiB
    # physical), ~48 MiB on v7x (64 MiB physical).
    try:
        cap = pltpu.get_tpu_info().vmem_capacity_bytes
    except Exception:
        cap = 64 * 1024 * 1024
    return min(int(cap * 3 // 4), 100 * 1024 * 1024)


# ----------------------------------------------------------------------------
# Fused GIN layers kernel: grid = (num_layer,).  Per-layer weights stream along
# the grid axis; node state h, adjacency A and count matrix C stay resident.
# ----------------------------------------------------------------------------
def gin_layers_kernel(h0_ref, a_ref, c_ref, et_ref, w1_ref, w2_ref, vec_ref,
                      hout_ref, h_scr, *, n_true, d_pad):
    layer = pl.program_id(0)
    num_layer = pl.num_programs(0)

    @pl.when(layer == 0)
    def _():
        h_scr[...] = h0_ref[...]

    h = h_scr[...]                                            # bf16 [Np, Dp]

    # --- GINEConv message passing (dense-adjacency form):
    #       agg[i] = sum_{e: dst(e)=i} (h[src(e)] + edge_emb(e))
    #              = (A @ h)[i] + (C @ ET_l)[i]
    agg = jnp.dot(a_ref[...], h, preferred_element_type=jnp.float32)
    agg = agg + jnp.dot(c_ref[...], et_ref[0],
                        preferred_element_type=jnp.float32)

    vec = vec_ref[0]                                          # f32 [8, Hp]
    b1 = vec[0:1, :]                                          # [1, Hp]
    b2 = vec[1:2, 0:d_pad]                                    # [1, Dp]
    gamma = vec[2:3, 0:d_pad]
    beta = vec[3:4, 0:d_pad]

    # --- GIN MLP: Linear(D, 2D) -> ReLU -> Linear(2D, D)  (bf16 MXU, f32 acc)
    z = jnp.dot(agg.astype(jnp.bfloat16), w1_ref[0],
                preferred_element_type=jnp.float32) + b1
    z = jnp.maximum(z, 0.0)
    z = jnp.dot(z.astype(jnp.bfloat16), w2_ref[0],
                preferred_element_type=jnp.float32) + b2      # [Np, Dp]

    # --- BatchNorm1d (training-mode batch stats, eps=1e-5), single pass,
    #     padded node rows masked out of the statistics.
    rows = jax.lax.broadcasted_iota(jnp.int32, (z.shape[0], 1), 0)
    wmask = jnp.where(rows < n_true,
                      jnp.float32(1.0 / n_true), jnp.float32(0.0))
    zw = z * wmask
    mean = jnp.sum(zw, axis=0, keepdims=True)
    ex2 = jnp.sum(zw * z, axis=0, keepdims=True)
    var = jnp.maximum(ex2 - mean * mean, 0.0)
    scale = gamma * jax.lax.rsqrt(var + 1e-5)
    zn = (z - mean) * scale + beta

    @pl.when(layer < num_layer - 1)
    def _():
        # ReLU + carry for all but the last layer (dropout p=0 is identity).
        h_scr[...] = jnp.maximum(zn, 0.0).astype(jnp.bfloat16)

    @pl.when(layer == num_layer - 1)
    def _():
        # Last layer feeds the read-out head without ReLU (matches PyTorch).
        hout_ref[...] = zn.astype(jnp.bfloat16)


# ----------------------------------------------------------------------------
# Tiny read-out head kernel: mean pool + feat_lin + out_lin (single invocation)
# ----------------------------------------------------------------------------
def head_kernel(p_ref, invc_ref, h_ref, fw_ref, fb_ref,
                ow1_ref, ob1_ref, ow2_ref, ob2_ref, feat_ref, out_ref):
    # Exact 0/1 one-hot pooling matrix (bf16) with f32 1/count scaling.
    pooled = jnp.dot(p_ref[...], h_ref[...],
                     preferred_element_type=jnp.float32) * invc_ref[...]
    feat = jnp.dot(pooled.astype(jnp.bfloat16), fw_ref[...],
                   preferred_element_type=jnp.float32) + fb_ref[...]
    feat_ref[...] = feat
    t = jnp.maximum(
        jnp.dot(feat.astype(jnp.bfloat16), ow1_ref[...],
                preferred_element_type=jnp.float32) + ob1_ref[...], 0.0)
    out_ref[...] = jnp.dot(t.astype(jnp.bfloat16), ow2_ref[...],
                           preferred_element_type=jnp.float32) + ob2_ref[...]


# ----------------------------------------------------------------------------
# Wrapper
# ----------------------------------------------------------------------------
@functools.partial(jax.jit, static_argnums=(5,))
def ginet_forward(params, x, edge_index, edge_attr, batch, num_graphs):
    layers = params["layers"]
    num_layer = len(layers)
    emb_dim = params["x_emb1"].shape[1]
    feat_dim = params["feat_w"].shape[1]
    out_dim = params["out_w2"].shape[1]
    N = x.shape[0]
    B = num_graphs

    # Lane/sublane-dense padded sizes.  All padding is zero and is either
    # masked (BN stats) or sliced away, so results are unchanged.
    # (On v6e/v7x, rounding Np to 256 fills the 2x256x256 MXU even better.)
    Dp = _round_up(emb_dim, LANE)
    Hp = _round_up(2 * emb_dim, LANE)
    Fp = _round_up(feat_dim, LANE)
    Op = _round_up(out_dim, LANE)
    Np = _round_up(N, LANE)
    Bp = _round_up(B, SUBLANE)

    # ---- glue (plain JAX): embedding lookups, self loops, adjacency / count
    # matrices, packed per-layer weights.
    h0 = (_pad2(params["x_emb1"], NUM_ATOM_TYPE, Dp)[x[:, 0]]
          + _pad2(params["x_emb2"], NUM_CHIRALITY_TAG, Dp)[x[:, 1]])
    h0 = jnp.pad(h0, ((0, Np - N), (0, 0))).astype(jnp.bfloat16)            # [Np, Dp]

    self_idx = jnp.arange(N, dtype=edge_index.dtype)
    src = jnp.concatenate([edge_index[0], self_idx])
    dst = jnp.concatenate([edge_index[1], self_idx])
    sl_attr = jnp.stack([jnp.full((N,), 4, dtype=edge_attr.dtype),
                         jnp.zeros((N,), dtype=edge_attr.dtype)], axis=1)
    ea = jnp.concatenate([edge_attr, sl_attr], axis=0)                      # [E', 2]

    # Dense adjacency with self loops: (A @ h)[i] = sum_{e: dst(e)=i} h[src(e)].
    # TODO(synk): for very large sparse graphs replace the dense [Np,Np]
    # adjacency with a scalar-prefetched row-gather + tiled segment scatter-add
    # (and shard the layer work across v7x's 2 TensorCores).
    A = (jnp.zeros((Np, Np), jnp.float32)
         .at[dst, src].add(1.0)).astype(jnp.bfloat16)

    # Per-destination edge-attribute counts so the per-layer edge embedding is
    # computed in-kernel from the tiny tables: (C @ ET_l)[i] =
    #   sum_{e: dst(e)=i} (edge_emb1_l[type(e)] + edge_emb2_l[dir(e)]).
    C = jnp.zeros((Np, EK), jnp.float32)
    C = C.at[dst, ea[:, 0]].add(1.0)
    C = C.at[dst, NUM_BOND_TYPE + ea[:, 1]].add(1.0)
    C = C.astype(jnp.bfloat16)                                              # [Np, EK]

    def pack_et(lp):  # combined edge-embedding table, zero-padded to [EK, Dp]
        et = jnp.zeros((EK, Dp), jnp.float32)
        et = et.at[:NUM_BOND_TYPE, :emb_dim].set(lp["edge_emb1"])
        et = et.at[NUM_BOND_TYPE:NUM_BOND_TYPE + NUM_BOND_DIRECTION,
                   :emb_dim].set(lp["edge_emb2"])
        return et
    ET = jnp.stack([pack_et(lp) for lp in layers]).astype(jnp.bfloat16)     # [L,EK,Dp]

    W1 = jnp.stack([_pad2(lp["w1"], Dp, Hp) for lp in layers]).astype(jnp.bfloat16)
    W2 = jnp.stack([_pad2(lp["w2"], Hp, Dp) for lp in layers]).astype(jnp.bfloat16)

    def pack_vec(lp):  # b1 / b2 / gamma / beta packed into one small stream
        v = jnp.zeros((8, Hp), jnp.float32)
        v = v.at[0, :2 * emb_dim].set(lp["b1"][0])
        v = v.at[1, :emb_dim].set(lp["b2"][0])
        v = v.at[2, :emb_dim].set(lp["gamma"][0])
        v = v.at[3, :emb_dim].set(lp["beta"][0])
        return v
    VEC = jnp.stack([pack_vec(lp) for lp in layers])                        # [L,8,Hp]

    const2 = lambda l: (0, 0)
    per_layer3 = lambda l: (l, 0, 0)

    kernel = functools.partial(gin_layers_kernel, n_true=N, d_pad=Dp)
    h_final = pl.pallas_call(
        kernel,
        out_shape=jax.ShapeDtypeStruct((Np, Dp), jnp.bfloat16),
        grid=(num_layer,),
        in_specs=[
            pl.BlockSpec((Np, Dp), const2),           # h0   (resident)
            pl.BlockSpec((Np, Np), const2),           # A    (resident)
            pl.BlockSpec((Np, EK), const2),           # C    (resident)
            pl.BlockSpec((1, EK, Dp), per_layer3),    # ET   (per layer)
            pl.BlockSpec((1, Dp, Hp), per_layer3),    # W1
            pl.BlockSpec((1, Hp, Dp), per_layer3),    # W2
            pl.BlockSpec((1, 8, Hp), per_layer3),     # packed b1/b2/gamma/beta
        ],
        out_specs=pl.BlockSpec((Np, Dp), const2),
        scratch_shapes=[pltpu.VMEM((Np, Dp), jnp.bfloat16)],
        compiler_params=pltpu.CompilerParams(
            dimension_semantics=("arbitrary",),
            vmem_limit_bytes=_vmem_limit_bytes()),
    )(h0, A, C, ET, W1, W2, VEC)

    # ---- read-out head as a second tiny pallas_call (P / head weights are not
    # VMEM-resident during the layer loop).
    onehot_b = jax.nn.one_hot(batch, B, dtype=jnp.float32)                  # [N, B]
    counts = jnp.maximum(onehot_b.sum(axis=0), 1.0)                         # [B]
    P = jnp.pad(onehot_b.T, ((0, Bp - B), (0, Np - N))).astype(jnp.bfloat16)
    inv_counts = jnp.pad(1.0 / counts, (0, Bp - B)).reshape(Bp, 1)          # f32

    fw = _pad2(params["feat_w"], Dp, Fp).astype(jnp.bfloat16)
    fb = _pad2(params["feat_b"], 1, Fp)
    ow1 = _pad2(params["out_w1"], Fp, Fp).astype(jnp.bfloat16)
    ob1 = _pad2(params["out_b1"], 1, Fp)
    ow2 = _pad2(params["out_w2"], Fp, Op).astype(jnp.bfloat16)
    ob2 = _pad2(params["out_b2"], 1, Op)

    feat_p, out_p = pl.pallas_call(
        head_kernel,
        out_shape=(jax.ShapeDtypeStruct((Bp, Fp), jnp.float32),
                   jax.ShapeDtypeStruct((Bp, Op), jnp.float32)),
    )(P, inv_counts, h_final, fw, fb, ow1, ob1, ow2, ob2)

    # Strip padding (plain JAX).
    return feat_p[:B, :feat_dim], out_p[:B, :out_dim]


# ----------------------------------------------------------------------------
# Deterministic parameter init (synthetic — shapes match GINet.__init__)
# ----------------------------------------------------------------------------
def init_params(key, num_layer, emb_dim, feat_dim):
    def nxt():
        nonlocal key
        key, sub = jax.random.split(key)
        return sub

    def rnd(shape, scale=0.1):
        return (scale * jax.random.normal(nxt(), shape)).astype(jnp.float32)

    params = {
        "x_emb1": rnd((NUM_ATOM_TYPE, emb_dim)),
        "x_emb2": rnd((NUM_CHIRALITY_TAG, emb_dim)),
        "layers": [],
        "feat_w": rnd((emb_dim, feat_dim)),
        "feat_b": rnd((1, feat_dim)),
        "out_w1": rnd((feat_dim, feat_dim)),
        "out_b1": rnd((1, feat_dim)),
        "out_w2": rnd((feat_dim, feat_dim // 2)),
        "out_b2": rnd((1, feat_dim // 2)),
    }
    for _ in range(num_layer):
        params["layers"].append({
            "edge_emb1": rnd((NUM_BOND_TYPE, emb_dim)),
            "edge_emb2": rnd((NUM_BOND_DIRECTION, emb_dim)),
            "w1": rnd((emb_dim, 2 * emb_dim)),
            "b1": rnd((1, 2 * emb_dim)),
            "w2": rnd((2 * emb_dim, emb_dim)),
            "b2": rnd((1, emb_dim)),
            "gamma": jnp.ones((1, emb_dim), jnp.float32),   # BatchNorm1d defaults
            "beta": jnp.zeros((1, emb_dim), jnp.float32),
        })
    return params


# ----------------------------------------------------------------------------
if __name__ == "__main__":
    NUM_LAYER = 5
    EMB_DIM = 32
    FEAT_DIM = 32
    N_NODES = 16
    N_EDGES = 24
    N_GRAPHS = 2

    key = jax.random.PRNGKey(0)
    k_par, k_x0, k_x1, k_e, k_ea0, k_ea1 = jax.random.split(key, 6)

    params = init_params(k_par, NUM_LAYER, EMB_DIM, FEAT_DIM)

    # data.x : [N, 2] int (atom type, chirality tag)
    x = jnp.stack(
        [jax.random.randint(k_x0, (N_NODES,), 0, NUM_ATOM_TYPE),
         jax.random.randint(k_x1, (N_NODES,), 0, NUM_CHIRALITY_TAG)], axis=1
    ).astype(jnp.int32)
    # data.edge_index : [2, E]
    edge_index = jax.random.randint(k_e, (2, N_EDGES), 0, N_NODES).astype(jnp.int32)
    # data.edge_attr : [E, 2] (bond type 0..3 — type 4 reserved for self loops)
    edge_attr = jnp.stack(
        [jax.random.randint(k_ea0, (N_EDGES,), 0, 4),
         jax.random.randint(k_ea1, (N_EDGES,), 0, NUM_BOND_DIRECTION)], axis=1
    ).astype(jnp.int32)
    # data.batch : [N] graph assignment
    batch = jnp.repeat(jnp.arange(N_GRAPHS, dtype=jnp.int32), N_NODES // N_GRAPHS)

    feat, out = ginet_forward(params, x, edge_index, edge_attr, batch, N_GRAPHS)
    jax.block_until_ready(feat)
    jax.block_until_ready(out)

    assert feat.shape == (N_GRAPHS, FEAT_DIM)
    assert out.shape == (N_GRAPHS, FEAT_DIM // 2)
    # TODO(synk): BatchNorm uses training-mode batch statistics (no running
    # mean/var update), matching nn.BatchNorm1d in train(); dropout p=0 is
    # identity, so it is omitted.
    print("KERNEL_OK")
</pallas_src>

<mosaic_0001>
module attributes {stable_mosaic.version = 11 : i64} {
  func.func @gin_layers_kernel(%arg0: i32, %arg1: memref<128x128xbf16, #tpu.memory_space<vmem>>, %arg2: memref<128x128xbf16, #tpu.memory_space<vmem>>, %arg3: memref<128x128xbf16, #tpu.memory_space<vmem>>, %arg4: memref<1x128x128xbf16, #tpu.memory_space<vmem>>, %arg5: memref<1x128x128xbf16, #tpu.memory_space<vmem>>, %arg6: memref<1x128x128xbf16, #tpu.memory_space<vmem>>, %arg7: memref<1x8x128xf32, #tpu.memory_space<vmem>>, %arg8: memref<128x128xbf16, #tpu.memory_space<vmem>>, %arg9: memref<128x128xbf16, #tpu.memory_space<vmem>>) attributes {dimension_semantics = [#tpu.dimension_semantics<arbitrary>], iteration_bounds = array<i64: 5>, scalar_prefetch = 0 : i64, scratch_operands = 1 : i64, tpu.core_type = #tpu.core_type<tc>, window_params = [{pipeline_mode = #tpu.pipeline_mode<synchronous>, transform_indices = @transform_0, window_bounds = array<i64: 128, 128>}, {pipeline_mode = #tpu.pipeline_mode<synchronous>, transform_indices = @transform_1, window_bounds = array<i64: 128, 128>}, {pipeline_mode = #tpu.pipeline_mode<synchronous>, transform_indices = @transform_2, window_bounds = array<i64: 128, 128>}, {transform_indices = @transform_3, window_bounds = array<i64: 1, 128, 128>}, {transform_indices = @transform_4, window_bounds = array<i64: 1, 128, 128>}, {transform_indices = @transform_5, window_bounds = array<i64: 1, 128, 128>}, {transform_indices = @transform_6, window_bounds = array<i64: 1, 8, 128>}, {pipeline_mode = #tpu.pipeline_mode<synchronous>, transform_indices = @transform_7, window_bounds = array<i64: 128, 128>}]} {
    %c0_i32 = arith.constant 0 : i32
    %0 = arith.cmpi eq, %arg0, %c0_i32 : i32
    %1 = arith.extui %0 : i1 to i32
    %c0_i32_0 = arith.constant 0 : i32
    %2 = arith.cmpi ne, %1, %c0_i32_0 : i32
    scf.if %2 {
      %c0_31 = arith.constant 0 : index
      %c0_32 = arith.constant 0 : index
      %64 = vector.load %arg1[%c0_31, %c0_32] : memref<128x128xbf16, #tpu.memory_space<vmem>>, vector<128x128xbf16>
      %c0_33 = arith.constant 0 : index
      %c0_34 = arith.constant 0 : index
      %65 = vector.load %arg9[%c0_33, %c0_34] : memref<128x128xbf16, #tpu.memory_space<vmem>>, vector<128x128xbf16>
      tpu.vector_store %arg9[%c0_33, %c0_34], %64 {strides = array<i32>} : memref<128x128xbf16, #tpu.memory_space<vmem>>, vector<128x128xbf16>,
    } else {
    }
    %c0 = arith.constant 0 : index
    %c0_1 = arith.constant 0 : index
    %3 = vector.load %arg9[%c0, %c0_1] : memref<128x128xbf16, #tpu.memory_space<vmem>>, vector<128x128xbf16>
    %c0_2 = arith.constant 0 : index
    %c0_3 = arith.constant 0 : index
    %4 = vector.load %arg2[%c0_2, %c0_3] : memref<128x128xbf16, #tpu.memory_space<vmem>>, vector<128x128xbf16>
    %cst = arith.constant dense<0.000000e+00> : vector<128x128xf32>
    %5 = tpu.matmul %4, %3, %cst {dimension_numbers = #tpu.dot_dimension_numbers<[1], [0], [0], [1], [0, 0, 1, 1], [], []>} : vector<128x128xbf16>, vector<128x128xbf16>, vector<128x128xf32> -> vector<128x128xf32>
    %c0_4 = arith.constant 0 : index
    %c0_5 = arith.constant 0 : index
    %6 = vector.load %arg3[%c0_4, %c0_5] : memref<128x128xbf16, #tpu.memory_space<vmem>>, vector<128x128xbf16>
    %c0_6 = arith.constant 0 : index
    %c0_7 = arith.constant 0 : index
    %c0_8 = arith.constant 0 : index
    %7 = vector.load %arg4[%c0_6, %c0_7, %c0_8] : memref<1x128x128xbf16, #tpu.memory_space<vmem>>, vector<1x128x128xbf16>
    %8 = vector.shape_cast %7 : vector<1x128x128xbf16> to vector<128x128xbf16>
    %cst_9 = arith.constant dense<0.000000e+00> : vector<128x128xf32>
    %9 = tpu.matmul %6, %8, %cst_9 {dimension_numbers = #tpu.dot_dimension_numbers<[1], [0], [0], [1], [0, 0, 1, 1], [], []>} : vector<128x128xbf16>, vector<128x128xbf16>, vector<128x128xf32> -> vector<128x128xf32>
    %10 = arith.addf %5, %9 : vector<128x128xf32>
    %c0_10 = arith.constant 0 : index
    %c0_11 = arith.constant 0 : index
    %c0_12 = arith.constant 0 : index
    %11 = vector.load %arg7[%c0_10, %c0_11, %c0_12] : memref<1x8x128xf32, #tpu.memory_space<vmem>>, vector<1x8x128xf32>
    %12 = vector.shape_cast %11 : vector<1x8x128xf32> to vector<8x128xf32>
    %13 = vector.extract_strided_slice %12 {offsets = [0, 0], sizes = [1, 128], strides = [1, 1]} : vector<8x128xf32> to vector<1x128xf32>
    %14 = vector.extract_strided_slice %12 {offsets = [1, 0], sizes = [1, 128], strides = [1, 1]} : vector<8x128xf32> to vector<1x128xf32>
    %15 = vector.extract_strided_slice %12 {offsets = [2, 0], sizes = [1, 128], strides = [1, 1]} : vector<8x128xf32> to vector<1x128xf32>
    %16 = vector.extract_strided_slice %12 {offsets = [3, 0], sizes = [1, 128], strides = [1, 1]} : vector<8x128xf32> to vector<1x128xf32>
    %17 = arith.truncf %10 : vector<128x128xf32> to vector<128x128xbf16>
    %c0_13 = arith.constant 0 : index
    %c0_14 = arith.constant 0 : index
    %c0_15 = arith.constant 0 : index
    %18 = vector.load %arg5[%c0_13, %c0_14, %c0_15] : memref<1x128x128xbf16, #tpu.memory_space<vmem>>, vector<1x128x128xbf16>
    %19 = vector.shape_cast %18 : vector<1x128x128xbf16> to vector<128x128xbf16>
    %cst_16 = arith.constant dense<0.000000e+00> : vector<128x128xf32>
    %20 = tpu.matmul %17, %19, %cst_16 {dimension_numbers = #tpu.dot_dimension_numbers<[1], [0], [0], [1], [0, 0, 1, 1], [], []>} : vector<128x128xbf16>, vector<128x128xbf16>, vector<128x128xf32> -> vector<128x128xf32>
    %21 = vector.broadcast %13 : vector<1x128xf32> to vector<128x128xf32>
    %22 = arith.addf %20, %21 : vector<128x128xf32>
    %cst_17 = arith.constant 0.000000e+00 : f32
    %23 = vector.broadcast %cst_17 : f32 to vector<128x128xf32>
    %24 = arith.maximumf %22, %23 : vector<128x128xf32>
    %25 = arith.truncf %24 : vector<128x128xf32> to vector<128x128xbf16>
    %c0_18 = arith.constant 0 : index
    %c0_19 = arith.constant 0 : index
    %c0_20 = arith.constant 0 : index
    %26 = vector.load %arg6[%c0_18, %c0_19, %c0_20] : memref<1x128x128xbf16, #tpu.memory_space<vmem>>, vector<1x128x128xbf16>
    %27 = vector.shape_cast %26 : vector<1x128x128xbf16> to vector<128x128xbf16>
    %cst_21 = arith.constant dense<0.000000e+00> : vector<128x128xf32>
    %28 = tpu.matmul %25, %27, %cst_21 {dimension_numbers = #tpu.dot_dimension_numbers<[1], [0], [0], [1], [0, 0, 1, 1], [], []>} : vector<128x128xbf16>, vector<128x128xbf16>, vector<128x128xf32> -> vector<128x128xf32>
    %29 = vector.broadcast %14 : vector<1x128xf32> to vector<128x128xf32>
    %30 = arith.addf %28, %29 : vector<128x128xf32>
    %31 = tpu.iota {dimensions = array<i32: 0>} : vector<128x1xi32>
    %c16_i32 = arith.constant 16 : i32
    %32 = vector.broadcast %c16_i32 : i32 to vector<128x1xi32>
    %33 = arith.cmpi slt, %31, %32 : vector<128x1xi32>
    %cst_22 = arith.constant 6.250000e-02 : f32
    %cst_23 = arith.constant 0.000000e+00 : f32
    %34 = vector.broadcast %cst_22 : f32 to vector<128x1xf32>
    %35 = vector.broadcast %cst_23 : f32 to vector<128x1xf32>
    %36 = arith.select %33, %34, %35 : vector<128x1xi1>, vector<128x1xf32>
    %37 = vector.broadcast %36 : vector<128x1xf32> to vector<128x128xf32>
    %38 = arith.mulf %30, %37 : vector<128x128xf32>
    %cst_24 = arith.constant dense<0.000000e+00> : vector<128xf32>
    %39 = vector.multi_reduction <add>, %38, %cst_24 [0] : vector<128x128xf32> to vector<128xf32>
    %40 = vector.shape_cast %39 : vector<128xf32> to vector<1x128xf32>
    %41 = arith.mulf %38, %30 : vector<128x128xf32>
    %cst_25 = arith.constant dense<0.000000e+00> : vector<128xf32>
    %42 = vector.multi_reduction <add>, %41, %cst_25 [0] : vector<128x128xf32> to vector<128xf32>
    %43 = vector.shape_cast %42 : vector<128xf32> to vector<1x128xf32>
    %44 = arith.mulf %40, %40 : vector<1x128xf32>
    %45 = arith.subf %43, %44 : vector<1x128xf32>
    %cst_26 = arith.constant 0.000000e+00 : f32
    %46 = vector.broadcast %cst_26 : f32 to vector<1x128xf32>
    %47 = arith.maximumf %45, %46 : vector<1x128xf32>
    %cst_27 = arith.constant 9.99999974E-6 : f32
    %48 = vector.broadcast %cst_27 : f32 to vector<1x128xf32>
    %49 = arith.addf %47, %48 : vector<1x128xf32>
    %50 = math.rsqrt %49 : vector<1x128xf32>
    %51 = arith.mulf %15, %50 : vector<1x128xf32>
    %52 = vector.broadcast %40 : vector<1x128xf32> to vector<128x128xf32>
    %53 = arith.subf %30, %52 : vector<128x128xf32>
    %54 = vector.broadcast %51 : vector<1x128xf32> to vector<128x128xf32>
    %55 = arith.mulf %53, %54 : vector<128x128xf32>
    %56 = vector.broadcast %16 : vector<1x128xf32> to vector<128x128xf32>
    %57 = arith.addf %55, %56 : vector<128x128xf32>
    %c4_i32 = arith.constant 4 : i32
    %58 = arith.cmpi slt, %arg0, %c4_i32 : i32
    %59 = arith.extui %58 : i1 to i32
    %c0_i32_28 = arith.constant 0 : i32
    %60 = arith.cmpi ne, %59, %c0_i32_28 : i32
    scf.if %60 {
      %cst_31 = arith.constant 0.000000e+00 : f32
      %64 = vector.broadcast %cst_31 : f32 to vector<128x128xf32>
      %65 = arith.maximumf %57, %64 : vector<128x128xf32>
      %66 = arith.truncf %65 : vector<128x128xf32> to vector<128x128xbf16>
      %c0_32 = arith.constant 0 : index
      %c0_33 = arith.constant 0 : index
      %67 = vector.load %arg9[%c0_32, %c0_33] : memref<128x128xbf16, #tpu.memory_space<vmem>>, vector<128x128xbf16>
      tpu.vector_store %arg9[%c0_32, %c0_33], %66 {strides = array<i32>} : memref<128x128xbf16, #tpu.memory_space<vmem>>, vector<128x128xbf16>,
    } else {
    }
    %c4_i32_29 = arith.constant 4 : i32
    %61 = arith.cmpi eq, %arg0, %c4_i32_29 : i32
    %62 = arith.extui %61 : i1 to i32
    %c0_i32_30 = arith.constant 0 : i32
    %63 = arith.cmpi ne, %62, %c0_i32_30 : i32
    scf.if %63 {
      %64 = arith.truncf %57 : vector<128x128xf32> to vector<128x128xbf16>
      %c0_31 = arith.constant 0 : index
      %c0_32 = arith.constant 0 : index
      %65 = vector.load %arg8[%c0_31, %c0_32] : memref<128x128xbf16, #tpu.memory_space<vmem>>, vector<128x128xbf16>
      tpu.vector_store %arg8[%c0_31, %c0_32], %64 {strides = array<i32>} : memref<128x128xbf16, #tpu.memory_space<vmem>>, vector<128x128xbf16>,
    } else {
    }
    return
  }
  func.func @transform_0(%arg0: i32) -> (i32, i32) {
    %c0_i32 = arith.constant 0 : i32
    %c0_i32_0 = arith.constant 0 : i32
    %c0_i32_1 = arith.constant 0 : i32
    return %c0_i32, %c0_i32_0 : i32, i32
  }
  func.func @transform_1(%arg0: i32) -> (i32, i32) {
    %c0_i32 = arith.constant 0 : i32
    %c0_i32_0 = arith.constant 0 : i32
    %c0_i32_1 = arith.constant 0 : i32
    return %c0_i32, %c0_i32_0 : i32, i32
  }
  func.func @transform_2(%arg0: i32) -> (i32, i32) {
    %c0_i32 = arith.constant 0 : i32
    %c0_i32_0 = arith.constant 0 : i32
    %c0_i32_1 = arith.constant 0 : i32
    return %c0_i32, %c0_i32_0 : i32, i32
  }
  func.func @transform_3(%arg0: i32) -> (i32, i32, i32) {
    %c0_i32 = arith.constant 0 : i32
    %c0_i32_0 = arith.constant 0 : i32
    %c0_i32_1 = arith.constant 0 : i32
    return %arg0, %c0_i32, %c0_i32_0 : i32, i32, i32
  }
  func.func @transform_4(%arg0: i32) -> (i32, i32, i32) {
    %c0_i32 = arith.constant 0 : i32
    %c0_i32_0 = arith.constant 0 : i32
    %c0_i32_1 = arith.constant 0 : i32
    return %arg0, %c0_i32, %c0_i32_0 : i32, i32, i32
  }
  func.func @transform_5(%arg0: i32) -> (i32, i32, i32) {
    %c0_i32 = arith.constant 0 : i32
    %c0_i32_0 = arith.constant 0 : i32
    %c0_i32_1 = arith.constant 0 : i32
    return %arg0, %c0_i32, %c0_i32_0 : i32, i32, i32
  }
  func.func @transform_6(%arg0: i32) -> (i32, i32, i32) {
    %c0_i32 = arith.constant 0 : i32
    %c0_i32_0 = arith.constant 0 : i32
    %c0_i32_1 = arith.constant 0 : i32
    return %arg0, %c0_i32, %c0_i32_0 : i32, i32, i32
  }
  func.func @transform_7(%arg0: i32) -> (i32, i32) {
    %c0_i32 = arith.constant 0 : i32
    %c0_i32_0 = arith.constant 0 : i32
    %c0_i32_1 = arith.constant 0 : i32
    return %c0_i32, %c0_i32_0 : i32, i32
  }
}

module attributes {stable_mosaic.version = 11 : i64} {
  func.func @head_kernel(%arg0: memref<8x128xbf16, #tpu.memory_space<vmem>>, %arg1: memref<8x1xf32, #tpu.memory_space<vmem>>, %arg2: memref<128x128xbf16, #tpu.memory_space<vmem>>, %arg3: memref<128x128xbf16, #tpu.memory_space<vmem>>, %arg4: memref<1x128xf32, #tpu.memory_space<vmem>>, %arg5: memref<128x128xbf16, #tpu.memory_space<vmem>>, %arg6: memref<1x128xf32, #tpu.memory_space<vmem>>, %arg7: memref<128x128xbf16, #tpu.memory_space<vmem>>, %arg8: memref<1x128xf32, #tpu.memory_space<vmem>>, %arg9: memref<8x128xf32, #tpu.memory_space<vmem>>, %arg10: memref<8x128xf32, #tpu.memory_space<vmem>>) attributes {dimension_semantics = [], scalar_prefetch = 0 : i64, scratch_operands = 0 : i64, tpu.core_type = #tpu.core_type<tc>} {
    %c0 = arith.constant 0 : index
    %c0_0 = arith.constant 0 : index
    %0 = vector.load %arg0[%c0, %c0_0] : memref<8x128xbf16, #tpu.memory_space<vmem>>, vector<8x128xbf16>
    %c0_1 = arith.constant 0 : index
    %c0_2 = arith.constant 0 : index
    %1 = vector.load %arg2[%c0_1, %c0_2] : memref<128x128xbf16, #tpu.memory_space<vmem>>, vector<128x128xbf16>
    %cst = arith.constant dense<0.000000e+00> : vector<8x128xf32>
    %2 = tpu.matmul %0, %1, %cst {dimension_numbers = #tpu.dot_dimension_numbers<[1], [0], [0], [1], [0, 0, 1, 1], [], []>} : vector<8x128xbf16>, vector<128x128xbf16>, vector<8x128xf32> -> vector<8x128xf32>
    %c0_3 = arith.constant 0 : index
    %c0_4 = arith.constant 0 : index
    %3 = vector.load %arg1[%c0_3, %c0_4] : memref<8x1xf32, #tpu.memory_space<vmem>>, vector<8x1xf32>
    %4 = vector.broadcast %3 : vector<8x1xf32> to vector<8x128xf32>
    %5 = arith.mulf %2, %4 : vector<8x128xf32>
    %6 = arith.truncf %5 : vector<8x128xf32> to vector<8x128xbf16>
    %c0_5 = arith.constant 0 : index
    %c0_6 = arith.constant 0 : index
    %7 = vector.load %arg3[%c0_5, %c0_6] : memref<128x128xbf16, #tpu.memory_space<vmem>>, vector<128x128xbf16>
    %cst_7 = arith.constant dense<0.000000e+00> : vector<8x128xf32>
    %8 = tpu.matmul %6, %7, %cst_7 {dimension_numbers = #tpu.dot_dimension_numbers<[1], [0], [0], [1], [0, 0, 1, 1], [], []>} : vector<8x128xbf16>, vector<128x128xbf16>, vector<8x128xf32> -> vector<8x128xf32>
    %c0_8 = arith.constant 0 : index
    %c0_9 = arith.constant 0 : index
    %9 = vector.load %arg4[%c0_8, %c0_9] : memref<1x128xf32, #tpu.memory_space<vmem>>, vector<1x128xf32>
    %10 = vector.broadcast %9 : vector<1x128xf32> to vector<8x128xf32>
    %11 = arith.addf %8, %10 : vector<8x128xf32>
    %c0_10 = arith.constant 0 : index
    %c0_11 = arith.constant 0 : index
    %12 = vector.load %arg9[%c0_10, %c0_11] : memref<8x128xf32, #tpu.memory_space<vmem>>, vector<8x128xf32>
    tpu.vector_store %arg9[%c0_10, %c0_11], %11 {strides = array<i32>} : memref<8x128xf32, #tpu.memory_space<vmem>>, vector<8x128xf32>,
    %13 = arith.truncf %11 : vector<8x128xf32> to vector<8x128xbf16>
    %c0_12 = arith.constant 0 : index
    %c0_13 = arith.constant 0 : index
    %14 = vector.load %arg5[%c0_12, %c0_13] : memref<128x128xbf16, #tpu.memory_space<vmem>>, vector<128x128xbf16>
    %cst_14 = arith.constant dense<0.000000e+00> : vector<8x128xf32>
    %15 = tpu.matmul %13, %14, %cst_14 {dimension_numbers = #tpu.dot_dimension_numbers<[1], [0], [0], [1], [0, 0, 1, 1], [], []>} : vector<8x128xbf16>, vector<128x128xbf16>, vector<8x128xf32> -> vector<8x128xf32>
    %c0_15 = arith.constant 0 : index
    %c0_16 = arith.constant 0 : index
    %16 = vector.load %arg6[%c0_15, %c0_16] : memref<1x128xf32, #tpu.memory_space<vmem>>, vector<1x128xf32>
    %17 = vector.broadcast %16 : vector<1x128xf32> to vector<8x128xf32>
    %18 = arith.addf %15, %17 : vector<8x128xf32>
    %cst_17 = arith.constant 0.000000e+00 : f32
    %19 = vector.broadcast %cst_17 : f32 to vector<8x128xf32>
    %20 = arith.maximumf %18, %19 : vector<8x128xf32>
    %21 = arith.truncf %20 : vector<8x128xf32> to vector<8x128xbf16>
    %c0_18 = arith.constant 0 : index
    %c0_19 = arith.constant 0 : index
    %22 = vector.load %arg7[%c0_18, %c0_19] : memref<128x128xbf16, #tpu.memory_space<vmem>>, vector<128x128xbf16>
    %cst_20 = arith.constant dense<0.000000e+00> : vector<8x128xf32>
    %23 = tpu.matmul %21, %22, %cst_20 {dimension_numbers = #tpu.dot_dimension_numbers<[1], [0], [0], [1], [0, 0, 1, 1], [], []>} : vector<8x128xbf16>, vector<128x128xbf16>, vector<8x128xf32> -> vector<8x128xf32>
    %c0_21 = arith.constant 0 : index
    %c0_22 = arith.constant 0 : index
    %24 = vector.load %arg8[%c0_21, %c0_22] : memref<1x128xf32, #tpu.memory_space<vmem>>, vector<1x128xf32>
    %25 = vector.broadcast %24 : vector<1x128xf32> to vector<8x128xf32>
    %26 = arith.addf %23, %25 : vector<8x128xf32>
    %c0_23 = arith.constant 0 : index
    %c0_24 = arith.constant 0 : index
    %27 = vector.load %arg10[%c0_23, %c0_24] : memref<8x128xf32, #tpu.memory_space<vmem>>, vector<8x128xf32>
    tpu.vector_store %arg10[%c0_23, %c0_24], %26 {strides = array<i32>} : memref<8x128xf32, #tpu.memory_space<vmem>>, vector<8x128xf32>,
    return
  }
}

</mosaic_0001>

<llo_original>
// kernel: ginet_forward.3
$region0: #{ginet_forward.3}
  #allocation0 [shape = 'u32[]', space=smem, size = 0x4, offset = 0x4, fixed_abs, tag = 'smem constant byte address 0x4 - core index']
  #allocation1 [shape = 'u32[72,128]{1,0:T(1,128)}', space=vmem, size = 0x9000, scoped, tag = 'internal scratch']
  %s0 = inlined_call_operand.vmem [shape: bf16[8,128], index: 0, kind: input, shape index: {}]
  %s1 = inlined_call_operand.vmem [shape: f32[8,1], index: 1, kind: input, shape index: {}]
  %s2 = inlined_call_operand.vmem [shape: bf16[128,128], index: 2, kind: input, shape index: {}]
  %s3 = inlined_call_operand.vmem [shape: bf16[128,128], index: 3, kind: input, shape index: {}]
  %s4 = inlined_call_operand.vmem [shape: f32[1,128], index: 4, kind: input, shape index: {}]
  %s5 = inlined_call_operand.vmem [shape: bf16[128,128], index: 5, kind: input, shape index: {}]
  %s6 = inlined_call_operand.vmem [shape: f32[1,128], index: 6, kind: input, shape index: {}]
  %s7 = inlined_call_operand.vmem [shape: bf16[128,128], index: 7, kind: input, shape index: {}]
  %s8 = inlined_call_operand.vmem [shape: f32[1,128], index: 8, kind: input, shape index: {}]
  %s9 = inlined_call_operand.vmem [shape: f32[8,128], index: 9, kind: output, shape index: {0}]
  %s10 = inlined_call_operand.vmem [shape: f32[8,128], index: 10, kind: output, shape index: {1}]
  %11 = xla_tuple %s9, %s10
  %s12 = sld [smem:[#allocation0]]
  $region54: #{ginet_forward.3} parent=0
    _
  %s14 = ssub.s32 1, %s12
  %s15 = scalar_select 0, %s14, %s12
  // Predicated region
  $region2: #{ginet_forward.3} parent=0 // pred_check
    _
  $region3: #{ginet_forward.3} parent=0 // pred_check_branch
    %17 = sbr.rel (0) target = $region5
  $region4: #{ginet_forward.3} parent=0 // pred_region
    _
  $region5: #{ginet_forward.3} parent=0 // pred_fallthru
    _
  // Predicated region
  $region6: #{ginet_forward.3} parent=0 // pred_check
    _
  $region7: #{ginet_forward.3} parent=0 // pred_check_branch
    %19 = sbr.rel (0) target = $region9
  $region8: #{ginet_forward.3} parent=0 // pred_region
    _
  $region9: #{ginet_forward.3} parent=0 // pred_fallthru
    _
  // Predicated region
  $region10: #{ginet_forward.3} parent=0 // pred_check
    _
  $region11: #{ginet_forward.3} parent=0 // pred_check_branch
    %21 = sbr.rel (0) target = $region13
  $region12: #{ginet_forward.3} parent=0 // pred_region
    _
  $region13: #{ginet_forward.3} parent=0 // pred_fallthru
    _
  // Predicated region
  $region14: #{ginet_forward.3} parent=0 // pred_check
    _
  $region15: #{ginet_forward.3} parent=0 // pred_check_branch
    %23 = sbr.rel (0) target = $region17
  $region16: #{ginet_forward.3} parent=0 // pred_region
    _
  $region17: #{ginet_forward.3} parent=0 // pred_fallthru
    _
  // Predicated region
  $region18: #{ginet_forward.3} parent=0 // pred_check
    _
  $region19: #{ginet_forward.3} parent=0 // pred_check_branch
    %25 = sbr.rel (0) target = $region21
  $region20: #{ginet_forward.3} parent=0 // pred_region
    _
  $region21: #{ginet_forward.3} parent=0 // pred_fallthru
    _
  // Predicated region
  $region22: #{ginet_forward.3} parent=0 // pred_check
    _
  $region23: #{ginet_forward.3} parent=0 // pred_check_branch
    %27 = sbr.rel (0) target = $region25
  $region24: #{ginet_forward.3} parent=0 // pred_region
    _
  $region25: #{ginet_forward.3} parent=0 // pred_fallthru
    _
  // Predicated region
  $region26: #{ginet_forward.3} parent=0 // pred_check
    _
  $region27: #{ginet_forward.3} parent=0 // pred_check_branch
    %29 = sbr.rel (0) target = $region29
  $region28: #{ginet_forward.3} parent=0 // pred_region
    _
  $region29: #{ginet_forward.3} parent=0 // pred_fallthru
    _
  // Predicated region
  $region30: #{ginet_forward.3} parent=0 // pred_check
    _
  $region31: #{ginet_forward.3} parent=0 // pred_check_branch
    %31 = sbr.rel (0) target = $region33
  $region32: #{ginet_forward.3} parent=0 // pred_region
    _
  $region33: #{ginet_forward.3} parent=0 // pred_fallthru
    _
  // Predicated region
  $region34: #{ginet_forward.3} parent=0 // pred_check
    _
  $region35: #{ginet_forward.3} parent=0 // pred_check_branch
    %33 = sbr.rel (0) target = $region37
  $region36: #{ginet_forward.3} parent=0 // pred_region
    _
  $region37: #{ginet_forward.3} parent=0 // pred_fallthru
    _
  %v34 = vld [vmem:[%s0] sm:$0xf]
  %v35 = vld [vmem:[%s2] sm:$0xf]
  %v36 = vld [vmem:[%s2 + $0x4] sm:$0xf]
  %v37 = vld [vmem:[%s2 + $0x8] sm:$0xf]
  %v38 = vld [vmem:[%s2 + $0xc] sm:$0xf]
  %v39 = vld [vmem:[%s2 + $0x10] sm:$0xf]
  %v40 = vld [vmem:[%s2 + $0x14] sm:$0xf]
  %v41 = vld [vmem:[%s2 + $0x18] sm:$0xf]
  %v42 = vld [vmem:[%s2 + $0x1c] sm:$0xf]
  %v43 = vld [vmem:[%s2 + $0x20] sm:$0xf]
  %v44 = vld [vmem:[%s2 + $0x24] sm:$0xf]
  %v45 = vld [vmem:[%s2 + $0x28] sm:$0xf]
  %v46 = vld [vmem:[%s2 + $0x2c] sm:$0xf]
  %v47 = vld [vmem:[%s2 + $0x30] sm:$0xf]
  %v48 = vld [vmem:[%s2 + $0x34] sm:$0xf]
  %v49 = vld [vmem:[%s2 + $0x38] sm:$0xf]
  %v50 = vld [vmem:[%s2 + $0x3c] sm:$0xf]
  %v67 = vunpack.c.l.b16 %v35
  %v68 = vunpack.c.l.b16 %v36
  %v69 = vunpack.c.l.b16 %v37
  %v70 = vunpack.c.l.b16 %v38
  %v71 = vunpack.c.l.b16 %v39
  %v72 = vunpack.c.l.b16 %v40
  %v73 = vunpack.c.l.b16 %v41
  %v74 = vunpack.c.l.b16 %v42
  %v75 = vunpack.c.l.b16 %v43
  %v76 = vunpack.c.l.b16 %v44
  %v77 = vunpack.c.l.b16 %v45
  %v78 = vunpack.c.l.b16 %v46
  %v79 = vunpack.c.l.b16 %v47
  %v80 = vunpack.c.l.b16 %v48
  %v81 = vunpack.c.l.b16 %v49
  %v82 = vunpack.c.l.b16 %v50
  %v83 = vpack.c.b16 %v68, %v67
  %v84 = vpack.c.b16 %v70, %v69
  %v85 = vpack.c.b16 %v72, %v71
  %v86 = vpack.c.b16 %v74, %v73
  %v87 = vpack.c.b16 %v76, %v75
  %v88 = vpack.c.b16 %v78, %v77
  %v89 = vpack.c.b16 %v80, %v79
  %v90 = vpack.c.b16 %v82, %v81
  %99 = vmatpush.bf16.msra.mxu0 %v90
  %100 = vmatpush.bf16.msra.mxu0 %v89
  %101 = vmatpush.bf16.msra.mxu0 %v88
  %102 = vmatpush.bf16.msra.mxu0 %v87
  %103 = vmatpush.bf16.msra.mxu0 %v86
  %104 = vmatpush.bf16.msra.mxu0 %v85
  %105 = vmatpush.bf16.msra.mxu0 %v84
  %106 = vmatpush.bf16.msra.mxu0 %v83
  %107 = vmatmul.bf16.gmra.mxu0 %v34
  %v108 = vpop.f32.mrf.mxu0
  %v109 = vadd.f32 0.0, %v108
  %v110 = vpop.f32.mrf.mxu0
  %111 = vdwg.mxu0
  %v112 = vld [vmem:[%s1] sm:$0xff]
  %114 = vset.pattern.permute.xlu0 0
  %115 = vperm.xlu0 %114, %v112
  %v116 = vpop.permute.xlu0 %115
  %v118 = vmul.f32 %v109, %v116
  %v119 = vpack.c.bf16 %v118, %v118
  %v120 = vld [vmem:[%s3] sm:$0xf]
  %v121 = vld [vmem:[%s3 + $0x4] sm:$0xf]
  %v122 = vld [vmem:[%s3 + $0x8] sm:$0xf]
  %v123 = vld [vmem:[%s3 + $0xc] sm:$0xf]
  %v124 = vld [vmem:[%s3 + $0x10] sm:$0xf]
  %v125 = vld [vmem:[%s3 + $0x14] sm:$0xf]
  %v126 = vld [vmem:[%s3 + $0x18] sm:$0xf]
  %v127 = vld [vmem:[%s3 + $0x1c] sm:$0xf]
  %v128 = vld [vmem:[%s3 + $0x20] sm:$0xf]
  %v129 = vld [vmem:[%s3 + $0x24] sm:$0xf]
  %v130 = vld [vmem:[%s3 + $0x28] sm:$0xf]
  %v131 = vld [vmem:[%s3 + $0x2c] sm:$0xf]
  %v132 = vld [vmem:[%s3 + $0x30] sm:$0xf]
  %v133 = vld [vmem:[%s3 + $0x34] sm:$0xf]
  %v134 = vld [vmem:[%s3 + $0x38] sm:$0xf]
  %v135 = vld [vmem:[%s3 + $0x3c] sm:$0xf]
  %v136 = vld [vmem:[%s4] sm:$0x1]
  %v138 = vperm.slane %v136, 0
  %v156 = vunpack.c.l.b16 %v120
  %v157 = vunpack.c.l.b16 %v121
  %v158 = vunpack.c.l.b16 %v122
  %v159 = vunpack.c.l.b16 %v123
  %v160 = vunpack.c.l.b16 %v124
  %v161 = vunpack.c.l.b16 %v125
  %v162 = vunpack.c.l.b16 %v126
  %v163 = vunpack.c.l.b16 %v127
  %v164 = vunpack.c.l.b16 %v128
  %v165 = vunpack.c.l.b16 %v129
  %v166 = vunpack.c.l.b16 %v130
  %v167 = vunpack.c.l.b16 %v131
  %v168 = vunpack.c.l.b16 %v132
  %v169 = vunpack.c.l.b16 %v133
  %v170 = vunpack.c.l.b16 %v134
  %v171 = vunpack.c.l.b16 %v135
  %v172 = vpack.c.b16 %v157, %v156
  %v173 = vpack.c.b16 %v159, %v158
  %v174 = vpack.c.b16 %v161, %v160
  %v175 = vpack.c.b16 %v163, %v162
  %v176 = vpack.c.b16 %v165, %v164
  %v177 = vpack.c.b16 %v167, %v166
  %v178 = vpack.c.b16 %v169, %v168
  %v179 = vpack.c.b16 %v171, %v170
  %188 = vmatpush.bf16.msra.mxu0 %v179
  %189 = vmatpush.bf16.msra.mxu0 %v178
  %190 = vmatpush.bf16.msra.mxu0 %v177
  %191 = vmatpush.bf16.msra.mxu0 %v176
  %192 = vmatpush.bf16.msra.mxu0 %v175
  %193 = vmatpush.bf16.msra.mxu0 %v174
  %194 = vmatpush.bf16.msra.mxu0 %v173
  %195 = vmatpush.bf16.msra.mxu0 %v172
  %196 = vmatmul.bf16.gmra.mxu0 %v119
  %v197 = vpop.f32.mrf.mxu0
  %v198 = vadd.f32 %v138, %v197
  %v199 = vpop.f32.mrf.mxu0
  %200 = vdwg.mxu0
  %201 = vst [vmem:[%s9] sm:$0xff] %v198
  %v202 = vpack.c.bf16 %v198, %v198
  %v203 = vld [vmem:[%s5] sm:$0xf]
  %v204 = vld [vmem:[%s5 + $0x4] sm:$0xf]
  %v205 = vld [vmem:[%s5 + $0x8] sm:$0xf]
  %v206 = vld [vmem:[%s5 + $0xc] sm:$0xf]
  %v207 = vld [vmem:[%s5 + $0x10] sm:$0xf]
  %v208 = vld [vmem:[%s5 + $0x14] sm:$0xf]
  %v209 = vld [vmem:[%s5 + $0x18] sm:$0xf]
  %v210 = vld [vmem:[%s5 + $0x1c] sm:$0xf]
  %v211 = vld [vmem:[%s5 + $0x20] sm:$0xf]
  %v212 = vld [vmem:[%s5 + $0x24] sm:$0xf]
  %v213 = vld [vmem:[%s5 + $0x28] sm:$0xf]
  %v214 = vld [vmem:[%s5 + $0x2c] sm:$0xf]
  %v215 = vld [vmem:[%s5 + $0x30] sm:$0xf]
  %v216 = vld [vmem:[%s5 + $0x34] sm:$0xf]
  %v217 = vld [vmem:[%s5 + $0x38] sm:$0xf]
  %v218 = vld [vmem:[%s5 + $0x3c] sm:$0xf]
  %v219 = vld [vmem:[%s6] sm:$0x1]
  %v221 = vperm.slane %v219, 0
  %v239 = vunpack.c.l.b16 %v203
  %v240 = vunpack.c.l.b16 %v204
  %v241 = vunpack.c.l.b16 %v205
  %v242 = vunpack.c.l.b16 %v206
  %v243 = vunpack.c.l.b16 %v207
  %v244 = vunpack.c.l.b16 %v208
  %v245 = vunpack.c.l.b16 %v209
  %v246 = vunpack.c.l.b16 %v210
  %v247 = vunpack.c.l.b16 %v211
  %v248 = vunpack.c.l.b16 %v212
  %v249 = vunpack.c.l.b16 %v213
  %v250 = vunpack.c.l.b16 %v214
  %v251 = vunpack.c.l.b16 %v215
  %v252 = vunpack.c.l.b16 %v216
  %v253 = vunpack.c.l.b16 %v217
  %v254 = vunpack.c.l.b16 %v218
  %v255 = vpack.c.b16 %v240, %v239
  %v256 = vpack.c.b16 %v242, %v241
  %v257 = vpack.c.b16 %v244, %v243
  %v258 = vpack.c.b16 %v246, %v245
  %v259 = vpack.c.b16 %v248, %v247
  %v260 = vpack.c.b16 %v250, %v249
  %v261 = vpack.c.b16 %v252, %v251
  %v262 = vpack.c.b16 %v254, %v253
  %271 = vmatpush.bf16.msra.mxu0 %v262
  %272 = vmatpush.bf16.msra.mxu0 %v261
  %273 = vmatpush.bf16.msra.mxu0 %v260
  %274 = vmatpush.bf16.msra.mxu0 %v259
  %275 = vmatpush.bf16.msra.mxu0 %v258
  %276 = vmatpush.bf16.msra.mxu0 %v257
  %277 = vmatpush.bf16.msra.mxu0 %v256
  %278 = vmatpush.bf16.msra.mxu0 %v255
  %279 = vmatmul.bf16.gmra.mxu0 %v202
  %v280 = vpop.f32.mrf.mxu0
  %v281 = vadd.f32 %v221, %v280
  %v282 = vpop.f32.mrf.mxu0
  %283 = vdwg.mxu0
  %v284 = vmax.f32 %v281, 0.0
  %v285 = vpack.c.bf16 %v284, %v284
  %v286 = vld [vmem:[%s7] sm:$0xf]
  %v287 = vld [vmem:[%s7 + $0x4] sm:$0xf]
  %v288 = vld [vmem:[%s7 + $0x8] sm:$0xf]
  %v289 = vld [vmem:[%s7 + $0xc] sm:$0xf]
  %v290 = vld [vmem:[%s7 + $0x10] sm:$0xf]
  %v291 = vld [vmem:[%s7 + $0x14] sm:$0xf]
  %v292 = vld [vmem:[%s7 + $0x18] sm:$0xf]
  %v293 = vld [vmem:[%s7 + $0x1c] sm:$0xf]
  %v294 = vld [vmem:[%s7 + $0x20] sm:$0xf]
  %v295 = vld [vmem:[%s7 + $0x24] sm:$0xf]
  %v296 = vld [vmem:[%s7 + $0x28] sm:$0xf]
  %v297 = vld [vmem:[%s7 + $0x2c] sm:$0xf]
  %v298 = vld [vmem:[%s7 + $0x30] sm:$0xf]
  %v299 = vld [vmem:[%s7 + $0x34] sm:$0xf]
  %v300 = vld [vmem:[%s7 + $0x38] sm:$0xf]
  %v301 = vld [vmem:[%s7 + $0x3c] sm:$0xf]
  %v302 = vld [vmem:[%s8] sm:$0x1]
  %v304 = vperm.slane %v302, 0
  %v322 = vunpack.c.l.b16 %v286
  %v323 = vunpack.c.l.b16 %v287
  %v324 = vunpack.c.l.b16 %v288
  %v325 = vunpack.c.l.b16 %v289
  %v326 = vunpack.c.l.b16 %v290
  %v327 = vunpack.c.l.b16 %v291
  %v328 = vunpack.c.l.b16 %v292
  %v329 = vunpack.c.l.b16 %v293
  %v330 = vunpack.c.l.b16 %v294
  %v331 = vunpack.c.l.b16 %v295
  %v332 = vunpack.c.l.b16 %v296
  %v333 = vunpack.c.l.b16 %v297
  %v334 = vunpack.c.l.b16 %v298
  %v335 = vunpack.c.l.b16 %v299
  %v336 = vunpack.c.l.b16 %v300
  %v337 = vunpack.c.l.b16 %v301
  %v338 = vpack.c.b16 %v323, %v322
  %v339 = vpack.c.b16 %v325, %v324
  %v340 = vpack.c.b16 %v327, %v326
  %v341 = vpack.c.b16 %v329, %v328
  %v342 = vpack.c.b16 %v331, %v330
  %v343 = vpack.c.b16 %v333, %v332
  %v344 = vpack.c.b16 %v335, %v334
  %v345 = vpack.c.b16 %v337, %v336
  %354 = vmatpush.bf16.msra.mxu0 %v345
  %355 = vmatpush.bf16.msra.mxu0 %v344
  %356 = vmatpush.bf16.msra.mxu0 %v343
  %357 = vmatpush.bf16.msra.mxu0 %v342
  %358 = vmatpush.bf16.msra.mxu0 %v341
  %359 = vmatpush.bf16.msra.mxu0 %v340
  %360 = vmatpush.bf16.msra.mxu0 %v339
  %361 = vmatpush.bf16.msra.mxu0 %v338
  %362 = vmatmul.bf16.gmra.mxu0 %v285
  %v363 = vpop.f32.mrf.mxu0
  %v364 = vadd.f32 %v304, %v363
  %v365 = vpop.f32.mrf.mxu0
  %366 = vdwg.mxu0
  %367 = vst [vmem:[%s10] sm:$0xff] %v364
  // Predicated region
  $region38: #{ginet_forward.3} parent=0 // pred_check
    _
  $region39: #{ginet_forward.3} parent=0 // pred_check_branch
    %369 = sbr.rel (0) target = $region41
  $region40: #{ginet_forward.3} parent=0 // pred_region
    _
  $region41: #{ginet_forward.3} parent=0 // pred_fallthru
    _
  // Predicated region
  $region42: #{ginet_forward.3} parent=0 // pred_check
    _
  $region43: #{ginet_forward.3} parent=0 // pred_check_branch
    %371 = sbr.rel (0) target = $region45
  $region44: #{ginet_forward.3} parent=0 // pred_region
    _
  $region45: #{ginet_forward.3} parent=0 // pred_fallthru
    _
  // Predicated region
  $region46: #{ginet_forward.3} parent=0 // pred_check
    _
  $region47: #{ginet_forward.3} parent=0 // pred_check_branch
    %373 = sbr.rel (0) target = $region49
  $region48: #{ginet_forward.3} parent=0 // pred_region
    _
  $region49: #{ginet_forward.3} parent=0 // pred_fallthru
    _
  // Predicated region
  $region50: #{ginet_forward.3} parent=0 // pred_check
    _
  $region51: #{ginet_forward.3} parent=0 // pred_check_branch
    %375 = sbr.rel (0) target = $region53
  $region52: #{ginet_forward.3} parent=0 // pred_region
    _
  $region53: #{ginet_forward.3} parent=0 // pred_fallthru
    _

// kernel: ginet_forward.2
$region0: #{ginet_forward.2}
  #allocation0 [shape = 'u32[]', space=smem, size = 0x4, offset = 0x4, fixed_abs, tag = 'smem constant byte address 0x4 - core index']
  #allocation1 [shape = 'u32[72,128]{1,0:T(1,128)}', space=vmem, size = 0x9000, scoped, tag = 'internal scratch']
  #allocation2 [shape = 'bf16[128,128]{1,0:T(8,128)(2,1)}', space=vmem, size = 0x8000, scoped, tag = 'scratch operand']
  %s0 = inlined_call_operand.vmem [shape: bf16[128,128], index: 0, kind: input, shape index: {}]
  %s1 = inlined_call_operand.vmem [shape: bf16[128,128], index: 1, kind: input, shape index: {}]
  %s2 = inlined_call_operand.vmem [shape: bf16[128,128], index: 2, kind: input, shape index: {}]
  %s3 = inlined_call_operand.vmem [shape: bf16[5,128,128], index: 3, kind: input, shape index: {}]
  %s4 = inlined_call_operand.vmem [shape: bf16[5,128,128], index: 4, kind: input, shape index: {}]
  %s5 = inlined_call_operand.vmem [shape: bf16[5,128,128], index: 5, kind: input, shape index: {}]
  %s6 = inlined_call_operand.vmem [shape: f32[5,8,128], index: 6, kind: input, shape index: {}]
  %s7 = inlined_call_operand.vmem [shape: bf16[128,128], index: 7, kind: output, shape index: {}]
  %s8 = sld [smem:[#allocation0]]
  $region73: #{ginet_forward.2} parent=0
    _
  %s10 = ssub.s32 1, %s8
  %s11 = scalar_select 0, %s10, %s8
  loop: start=0, step=1, limit=7
  $region2: #{ginet_forward.2} parent=0 // loop_pre_header
    _
  $region3: #{ginet_forward.2} parent=0 // loop_header
    %s13 = sphi 0, %s17
    %p14 = scmp.ge.s32.totalorder %s13, 7
    %s21 = sphi 0, %s21
    %s23 = sphi 0, %s21
    %s24 = sphi 0, %s23
    %s38 = sphi 0, %s24
    %s42 = sphi 0, %s42
    %s44 = sphi 0, %s42
    %s45 = sphi 0, %s44
    %s59 = sphi 0, %s45
    %s63 = sphi 0, %s63
    %s65 = sphi 0, %s63
    %s66 = sphi 0, %s65
    %s80 = sphi 0, %s66
    %s86 = sphi 0, %s88
    %s89 = sphi 0, %s86
    %s90 = sphi 0, %s89
    %s106 = sphi 0, %s90
    %s112 = sphi 0, %s114
    %s115 = sphi 0, %s112
    %s116 = sphi 0, %s115
    %s132 = sphi 0, %s116
    %s138 = sphi 0, %s140
    %s141 = sphi 0, %s138
    %s142 = sphi 0, %s141
    %s158 = sphi 0, %s142
    %s164 = sphi 0, %s166
    %s167 = sphi 0, %s164
    %s168 = sphi 0, %s167
    %s184 = sphi 0, %s168
    %s188 = sphi 0, %s188
    %s190 = sphi 0, %s188
    %s191 = sphi 0, %s190
    %s205 = sphi 0, %s191
  $region4: #{ginet_forward.2} parent=0 // loop_header_branch
    %16 = sbr.rel (%p14) target = $region8
  $region5: #{ginet_forward.2} parent=0 // loop_body
    %s18 = ssub.s32 %s13, 1
    %s19 = ssub.s32 %s13, 2
    %s20 = sadd.s32 %s13, 1
    %s22 = sadd.s32 %s21, 1
    %p25 = scmp.eq.s32.totalorder %s13, 4
    %p26 = scmp.ne.s32.totalorder %s21, %s23
    %p27 = scmp.eq.s32.totalorder %s13, 0
    %p28 = por %p26, %p27
    %p29 = scmp.ne.s32.totalorder %s21, %s23
    %p30 = scmp.eq.s32.totalorder %s18, 4
    %p31 = por %p29, %p30
    %p32 = scmp.ne.s32.totalorder %s23, %s24
    %p33 = scmp.eq.s32.totalorder %s18, 0
    %p34 = por %p32, %p33
    %p35 = scmp.ne.s32.totalorder %s23, %s24
    %p36 = scmp.eq.s32.totalorder %s19, 4
    %p37 = por %p35, %p36
    %p39 = scmp.ne.s32.totalorder %s24, %s38
    %p40 = scmp.eq.s32.totalorder %s19, 0
    %p41 = por %p39, %p40
    %s43 = sadd.s32 %s42, 1
    %p46 = scmp.eq.s32.totalorder %s13, 4
    %p47 = scmp.ne.s32.totalorder %s42, %s44
    %p48 = scmp.eq.s32.totalorder %s13, 0
    %p49 = por %p47, %p48
    %p50 = scmp.ne.s32.totalorder %s42, %s44
    %p51 = scmp.eq.s32.totalorder %s18, 4
    %p52 = por %p50, %p51
    %p53 = scmp.ne.s32.totalorder %s44, %s45
    %p54 = scmp.eq.s32.totalorder %s18, 0
    %p55 = por %p53, %p54
    %p56 = scmp.ne.s32.totalorder %s44, %s45
    %p57 = scmp.eq.s32.totalorder %s19, 4
    %p58 = por %p56, %p57
    %p60 = scmp.ne.s32.totalorder %s45, %s59
    %p61 = scmp.eq.s32.totalorder %s19, 0
    %p62 = por %p60, %p61
    %s64 = sadd.s32 %s63, 1
    %p67 = scmp.eq.s32.totalorder %s13, 4
    %p68 = scmp.ne.s32.totalorder %s63, %s65
    %p69 = scmp.eq.s32.totalorder %s13, 0
    %p70 = por %p68, %p69
    %p71 = scmp.ne.s32.totalorder %s63, %s65
    %p72 = scmp.eq.s32.totalorder %s18, 4
    %p73 = por %p71, %p72
    %p74 = scmp.ne.s32.totalorder %s65, %s66
    %p75 = scmp.eq.s32.totalorder %s18, 0
    %p76 = por %p74, %p75
    %p77 = scmp.ne.s32.totalorder %s65, %s66
    %p78 = scmp.eq.s32.totalorder %s19, 4
    %p79 = por %p77, %p78
    %p81 = scmp.ne.s32.totalorder %s66, %s80
    %p82 = scmp.eq.s32.totalorder %s19, 0
    %p83 = por %p81, %p82
    %s84 = ssub.s32 %s13, %s20
    %p85 = scmp.eq.s32.totalorder %s84, 0
    %s87 = sadd.s32 %s86, 1
    %s88 = scalar_select %p85, %s86, %s87
    %p91 = pneg %p85
    %p92 = scmp.eq.s32.totalorder %s13, 4
    %p93 = por %p91, %p92
    %p94 = scmp.ne.s32.totalorder %s86, %s89
    %p95 = scmp.eq.s32.totalorder %s13, 0
    %p96 = por %p94, %p95
    %p97 = scmp.ne.s32.totalorder %s86, %s89
    %p98 = scmp.eq.s32.totalorder %s18, 4
    %p99 = por %p97, %p98
    %p100 = scmp.ne.s32.totalorder %s89, %s90
    %p101 = scmp.eq.s32.totalorder %s18, 0
    %p102 = por %p100, %p101
    %p103 = scmp.ne.s32.totalorder %s89, %s90
    %p104 = scmp.eq.s32.totalorder %s19, 4
    %p105 = por %p103, %p104
    %p107 = scmp.ne.s32.totalorder %s90, %s106
    %p108 = scmp.eq.s32.totalorder %s19, 0
    %p109 = por %p107, %p108
    %s110 = ssub.s32 %s13, %s20
    %p111 = scmp.eq.s32.totalorder %s110, 0
    %s113 = sadd.s32 %s112, 1
    %s114 = scalar_select %p111, %s112, %s113
    %p117 = pneg %p111
    %p118 = scmp.eq.s32.totalorder %s13, 4
    %p119 = por %p117, %p118
    %p120 = scmp.ne.s32.totalorder %s112, %s115
    %p121 = scmp.eq.s32.totalorder %s13, 0
    %p122 = por %p120, %p121
    %p123 = scmp.ne.s32.totalorder %s112, %s115
    %p124 = scmp.eq.s32.totalorder %s18, 4
    %p125 = por %p123, %p124
    %p126 = scmp.ne.s32.totalorder %s115, %s116
    %p127 = scmp.eq.s32.totalorder %s18, 0
    %p128 = por %p126, %p127
    %p129 = scmp.ne.s32.totalorder %s115, %s116
    %p130 = scmp.eq.s32.totalorder %s19, 4
    %p131 = por %p129, %p130
    %p133 = scmp.ne.s32.totalorder %s116, %s132
    %p134 = scmp.eq.s32.totalorder %s19, 0
    %p135 = por %p133, %p134
    %s136 = ssub.s32 %s13, %s20
    %p137 = scmp.eq.s32.totalorder %s136, 0
    %s139 = sadd.s32 %s138, 1
    %s140 = scalar_select %p137, %s138, %s139
    %p143 = pneg %p137
    %p144 = scmp.eq.s32.totalorder %s13, 4
    %p145 = por %p143, %p144
    %p146 = scmp.ne.s32.totalorder %s138, %s141
    %p147 = scmp.eq.s32.totalorder %s13, 0
    %p148 = por %p146, %p147
    %p149 = scmp.ne.s32.totalorder %s138, %s141
    %p150 = scmp.eq.s32.totalorder %s18, 4
    %p151 = por %p149, %p150
    %p152 = scmp.ne.s32.totalorder %s141, %s142
    %p153 = scmp.eq.s32.totalorder %s18, 0
    %p154 = por %p152, %p153
    %p155 = scmp.ne.s32.totalorder %s141, %s142
    %p156 = scmp.eq.s32.totalorder %s19, 4
    %p157 = por %p155, %p156
    %p159 = scmp.ne.s32.totalorder %s142, %s158
    %p160 = scmp.eq.s32.totalorder %s19, 0
    %p161 = por %p159, %p160
    %s162 = ssub.s32 %s13, %s20
    %p163 = scmp.eq.s32.totalorder %s162, 0
    %s165 = sadd.s32 %s164, 1
    %s166 = scalar_select %p163, %s164, %s165
    %p169 = pneg %p163
    %p170 = scmp.eq.s32.totalorder %s13, 4
    %p171 = por %p169, %p170
    %p172 = scmp.ne.s32.totalorder %s164, %s167
    %p173 = scmp.eq.s32.totalorder %s13, 0
    %p174 = por %p172, %p173
    %p175 = scmp.ne.s32.totalorder %s164, %s167
    %p176 = scmp.eq.s32.totalorder %s18, 4
    %p177 = por %p175, %p176
    %p178 = scmp.ne.s32.totalorder %s167, %s168
    %p179 = scmp.eq.s32.totalorder %s18, 0
    %p180 = por %p178, %p179
    %p181 = scmp.ne.s32.totalorder %s167, %s168
    %p182 = scmp.eq.s32.totalorder %s19, 4
    %p183 = por %p181, %p182
    %p185 = scmp.ne.s32.totalorder %s168, %s184
    %p186 = scmp.eq.s32.totalorder %s19, 0
    %p187 = por %p185, %p186
    %s189 = sadd.s32 %s188, 1
    %p192 = scmp.eq.s32.totalorder %s13, 4
    %p193 = scmp.ne.s32.totalorder %s188, %s190
    %p194 = scmp.eq.s32.totalorder %s13, 0
    %p195 = por %p193, %p194
    %p196 = scmp.ne.s32.totalorder %s188, %s190
    %p197 = scmp.eq.s32.totalorder %s18, 4
    %p198 = por %p196, %p197
    %p199 = scmp.ne.s32.totalorder %s190, %s191
    %p200 = scmp.eq.s32.totalorder %s18, 0
    %p201 = por %p199, %p200
    %p202 = scmp.ne.s32.totalorder %s190, %s191
    %p203 = scmp.eq.s32.totalorder %s19, 4
    %p204 = por %p202, %p203
    %p206 = scmp.ne.s32.totalorder %s191, %s205
    %p207 = scmp.eq.s32.totalorder %s19, 0
    %p208 = por %p206, %p207
    %p209 = scmp.le.s32.totalorder 1, %s13
    %p210 = scmp.lt.s32.totalorder %s13, 6
    %p211 = pnand %p209, %p210
    %p212 = pneg %p211
    // Predicated region
    $region9: #{ginet_forward.2} parent=5 // pred_check
      _
    $region10: #{ginet_forward.2} parent=5 // pred_check_branch
      %214 = sbr.rel (%p211) target = $region12
    $region11: #{ginet_forward.2} parent=5 // pred_region
      %s215 = ssub.s32 %s13, 1
      // Predicated region
      $region13: #{ginet_forward.2} parent=11 // pred_check
        %p216 = pneg %p34
      $region14: #{ginet_forward.2} parent=11 // pred_check_branch
        %218 = sbr.rel (%p216) target = $region16
      $region15: #{ginet_forward.2} parent=11 // pred_region
        _
      $region16: #{ginet_forward.2} parent=11 // pred_fallthru
        _
      // Predicated region
      $region17: #{ginet_forward.2} parent=11 // pred_check
        %p219 = pneg %p55
      $region18: #{ginet_forward.2} parent=11 // pred_check_branch
        %221 = sbr.rel (%p219) target = $region20
      $region19: #{ginet_forward.2} parent=11 // pred_region
        _
      $region20: #{ginet_forward.2} parent=11 // pred_fallthru
        _
      // Predicated region
      $region21: #{ginet_forward.2} parent=11 // pred_check
        %p222 = pneg %p76
      $region22: #{ginet_forward.2} parent=11 // pred_check_branch
        %224 = sbr.rel (%p222) target = $region24
      $region23: #{ginet_forward.2} parent=11 // pred_region
        _
      $region24: #{ginet_forward.2} parent=11 // pred_fallthru
        _
    $region12: #{ginet_forward.2} parent=5 // pred_fallthru
      _
    %p225 = scmp.lt.s32.totalorder %s13, 5
    // Predicated region
    $region25: #{ginet_forward.2} parent=5 // pred_check
      %p226 = pneg %p225
    $region26: #{ginet_forward.2} parent=5 // pred_check_branch
      %228 = sbr.rel (%p226) target = $region28
    $region27: #{ginet_forward.2} parent=5 // pred_region
      // Predicated region
      $region29: #{ginet_forward.2} parent=27 // pred_check
        %p229 = pneg %p96
      $region30: #{ginet_forward.2} parent=27 // pred_check_branch
        %231 = sbr.rel (%p229) target = $region32
      $region31: #{ginet_forward.2} parent=27 // pred_region
        %p232 = scmp.lt.s32.totalorder %s13, 4
        %s233 = scalar_select %p232, %s13, 4
        %s234 = smul.addr %s233, 16
        %s235 = smul.addr %s234, 4
        %s236 = scalar_lea.vmem %s3, %s235
      $region32: #{ginet_forward.2} parent=27 // pred_fallthru
        _
      // Predicated region
      $region33: #{ginet_forward.2} parent=27 // pred_check
        %p237 = pneg %p122
      $region34: #{ginet_forward.2} parent=27 // pred_check_branch
        %239 = sbr.rel (%p237) target = $region36
      $region35: #{ginet_forward.2} parent=27 // pred_region
        %p240 = scmp.lt.s32.totalorder %s13, 4
        %s241 = scalar_select %p240, %s13, 4
        %s242 = smul.addr %s241, 16
        %s243 = smul.addr %s242, 4
        %s244 = scalar_lea.vmem %s4, %s243
      $region36: #{ginet_forward.2} parent=27 // pred_fallthru
        _
      // Predicated region
      $region37: #{ginet_forward.2} parent=27 // pred_check
        %p245 = pneg %p148
      $region38: #{ginet_forward.2} parent=27 // pred_check_branch
        %247 = sbr.rel (%p245) target = $region40
      $region39: #{ginet_forward.2} parent=27 // pred_region
        %p248 = scmp.lt.s32.totalorder %s13, 4
        %s249 = scalar_select %p248, %s13, 4
        %s250 = smul.addr %s249, 16
        %s251 = smul.addr %s250, 4
        %s252 = scalar_lea.vmem %s5, %s251
      $region40: #{ginet_forward.2} parent=27 // pred_fallthru
        _
      // Predicated region
      $region41: #{ginet_forward.2} parent=27 // pred_check
        %p253 = pneg %p174
      $region42: #{ginet_forward.2} parent=27 // pred_check_branch
        %255 = sbr.rel (%p253) target = $region44
      $region43: #{ginet_forward.2} parent=27 // pred_region
        %p256 = scmp.lt.s32.totalorder %s13, 4
        %s257 = scalar_select %p256, %s13, 4
        %s258 = smul.addr %s257, 8
        %s259 = scalar_lea.vmem %s6, %s258
      $region44: #{ginet_forward.2} parent=27 // pred_fallthru
        _
    $region28: #{ginet_forward.2} parent=5 // pred_fallthru
      _
    %p260 = scmp.le.s32.totalorder 1, %s13
    %p261 = scmp.lt.s32.totalorder %s13, 6
    %p262 = pnand %p260, %p261
    %p263 = pneg %p262
    // Predicated region
    $region45: #{ginet_forward.2} parent=5 // pred_check
      _
    $region46: #{ginet_forward.2} parent=5 // pred_check_branch
      %265 = sbr.rel (%p262) target = $region48
    $region47: #{ginet_forward.2} parent=5 // pred_region
      %s266 = ssub.s32 %s13, 1
      %p267 = pneg %p34
      %p268 = pneg %p31
      %p269 = pneg %p55
      %p270 = pneg %p52
      %p271 = pneg %p76
      %p272 = pneg %p73
      %p273 = scmp.lt.s32.totalorder %s18, 4
      %s274 = scalar_select %p273, %s18, 4
      %s275 = smul.addr %s274, 16
      %s276 = smul.addr %s275, 4
      %s277 = scalar_lea.vmem %s3, %s276
      %p278 = pneg %p102
      %p279 = pneg %p99
      %p280 = scmp.lt.s32.totalorder %s18, 4
      %s281 = scalar_select %p280, %s18, 4
      %s282 = smul.addr %s281, 16
      %s283 = smul.addr %s282, 4
      %s284 = scalar_lea.vmem %s4, %s283
      %p285 = pneg %p128
      %p286 = pneg %p125
      %p287 = scmp.lt.s32.totalorder %s18, 4
      %s288 = scalar_select %p287, %s18, 4
      %s289 = smul.addr %s288, 16
      %s290 = smul.addr %s289, 4
      %s291 = scalar_lea.vmem %s5, %s290
      %p292 = pneg %p154
      %p293 = pneg %p151
      %p294 = scmp.lt.s32.totalorder %s18, 4
      %s295 = scalar_select %p294, %s18, 4
      %s296 = smul.addr %s295, 8
      %s297 = scalar_lea.vmem %s6, %s296
      %p298 = pneg %p180
      %p299 = pneg %p177
      %p300 = pneg %p201
      %p301 = pneg %p198
      %p302 = scmp.lt.s32.totalorder %s18, 4
      %s303 = scalar_select %p302, %s18, 4
      %s304 = smul.addr %s303, 16
      %s305 = smul.addr %s304, 4
      %s306 = scalar_lea.vmem %s3, %s305
      %p307 = scmp.lt.s32.totalorder %s18, 4
      %s308 = scalar_select %p307, %s18, 4
      %s309 = smul.addr %s308, 16
      %s310 = smul.addr %s309, 4
      %s311 = scalar_lea.vmem %s4, %s310
      %p312 = scmp.lt.s32.totalorder %s18, 4
      %s313 = scalar_select %p312, %s18, 4
      %s314 = smul.addr %s313, 16
      %s315 = smul.addr %s314, 4
      %s316 = scalar_lea.vmem %s5, %s315
      %p317 = scmp.lt.s32.totalorder %s18, 4
      %s318 = scalar_select %p317, %s18, 4
      %s319 = smul.addr %s318, 8
      %s320 = scalar_lea.vmem %s6, %s319
      %p321 = scmp.eq.s32.totalorder %s18, 0
      // Predicated region
      $region49: #{ginet_forward.2} parent=47 // pred_check
        %p322 = pneg %p321
      $region50: #{ginet_forward.2} parent=47 // pred_check_branch
        %324 = sbr.rel (%p322) target = $region52
      $region51: #{ginet_forward.2} parent=47 // pred_region
        %v325 = vld [vmem:[%s0] sm:$0xf]
        %v326 = vld [vmem:[%s0 + $0x4] sm:$0xf]
        %v327 = vld [vmem:[%s0 + $0x8] sm:$0xf]
        %v328 = vld [vmem:[%s0 + $0xc] sm:$0xf]
        %v329 = vld [vmem:[%s0 + $0x10] sm:$0xf]
        %v330 = vld [vmem:[%s0 + $0x14] sm:$0xf]
        %v331 = vld [vmem:[%s0 + $0x18] sm:$0xf]
        %v332 = vld [vmem:[%s0 + $0x1c] sm:$0xf]
        %v333 = vld [vmem:[%s0 + $0x20] sm:$0xf]
        %v334 = vld [vmem:[%s0 + $0x24] sm:$0xf]
        %v335 = vld [vmem:[%s0 + $0x28] sm:$0xf]
        %v336 = vld [vmem:[%s0 + $0x2c] sm:$0xf]
        %v337 = vld [vmem:[%s0 + $0x30] sm:$0xf]
        %v338 = vld [vmem:[%s0 + $0x34] sm:$0xf]
        %v339 = vld [vmem:[%s0 + $0x38] sm:$0xf]
        %v340 = vld [vmem:[%s0 + $0x3c] sm:$0xf]
        %341 = vst [vmem:[#allocation2] sm:$0xf] %v325
        %342 = vst [vmem:[#allocation2 + $0x4] sm:$0xf] %v326
        %343 = vst [vmem:[#allocation2 + $0x8] sm:$0xf] %v327
        %344 = vst [vmem:[#allocation2 + $0xc] sm:$0xf] %v328
        %345 = vst [vmem:[#allocation2 + $0x10] sm:$0xf] %v329
        %346 = vst [vmem:[#allocation2 + $0x14] sm:$0xf] %v330
        %347 = vst [vmem:[#allocation2 + $0x18] sm:$0xf] %v331
        %348 = vst [vmem:[#allocation2 + $0x1c] sm:$0xf] %v332
        %349 = vst [vmem:[#allocation2 + $0x20] sm:$0xf] %v333
        %350 = vst [vmem:[#allocation2 + $0x24] sm:$0xf] %v334
        %351 = vst [vmem:[#allocation2 + $0x28] sm:$0xf] %v335
        %352 = vst [vmem:[#allocation2 + $0x2c] sm:$0xf] %v336
        %353 = vst [vmem:[#allocation2 + $0x30] sm:$0xf] %v337
        %354 = vst [vmem:[#allocation2 + $0x34] sm:$0xf] %v338
        %355 = vst [vmem:[#allocation2 + $0x38] sm:$0xf] %v339
        %356 = vst [vmem:[#allocation2 + $0x3c] sm:$0xf] %v340
      $region52: #{ginet_forward.2} parent=47 // pred_fallthru
        _
      %v357 = vld [vmem:[#allocation2] sm:$0xf]
      %v358 = vld [vmem:[#allocation2 + $0x4] sm:$0xf]
      %v359 = vld [vmem:[#allocation2 + $0x8] sm:$0xf]
      %v360 = vld [vmem:[#allocation2 + $0xc] sm:$0xf]
      %v361 = vld [vmem:[#allocation2 + $0x10] sm:$0xf]
      %v362 = vld [vmem:[#allocation2 + $0x14] sm:$0xf]
      %v363 = vld [vmem:[#allocation2 + $0x18] sm:$0xf]
      %v364 = vld [vmem:[#allocation2 + $0x1c] sm:$0xf]
      %v365 = vld [vmem:[#allocation2 + $0x20] sm:$0xf]
      %v366 = vld [vmem:[#allocation2 + $0x24] sm:$0xf]
      %v367 = vld [vmem:[#allocation2 + $0x28] sm:$0xf]
      %v368 = vld [vmem:[#allocation2 + $0x2c] sm:$0xf]
      %v369 = vld [vmem:[#allocation2 + $0x30] sm:$0xf]
      %v370 = vld [vmem:[#allocation2 + $0x34] sm:$0xf]
      %v371 = vld [vmem:[#allocation2 + $0x38] sm:$0xf]
      %v372 = vld [vmem:[#allocation2 + $0x3c] sm:$0xf]
      %v373 = vld [vmem:[%s1] sm:$0xf]
      %v374 = vld [vmem:[%s1 + $0x4] sm:$0xf]
      %v375 = vld [vmem:[%s1 + $0x8] sm:$0xf]
      %v376 = vld [vmem:[%s1 + $0xc] sm:$0xf]
      %v377 = vld [vmem:[%s1 + $0x10] sm:$0xf]
      %v378 = vld [vmem:[%s1 + $0x14] sm:$0xf]
      %v379 = vld [vmem:[%s1 + $0x18] sm:$0xf]
      %v380 = vld [vmem:[%s1 + $0x1c] sm:$0xf]
      %v381 = vld [vmem:[%s1 + $0x20] sm:$0xf]
      %v382 = vld [vmem:[%s1 + $0x24] sm:$0xf]
      %v383 = vld [vmem:[%s1 + $0x28] sm:$0xf]
      %v384 = vld [vmem:[%s1 + $0x2c] sm:$0xf]
      %v385 = vld [vmem:[%s1 + $0x30] sm:$0xf]
      %v386 = vld [vmem:[%s1 + $0x34] sm:$0xf]
      %v387 = vld [vmem:[%s1 + $0x38] sm:$0xf]
      %v388 = vld [vmem:[%s1 + $0x3c] sm:$0xf]
      %v389 = vld [vmem:[%s2] sm:$0xf]
      %v390 = vld [vmem:[%s2 + $0x4] sm:$0xf]
      %v391 = vld [vmem:[%s2 + $0x8] sm:$0xf]
      %v392 = vld [vmem:[%s2 + $0xc] sm:$0xf]
      %v393 = vld [vmem:[%s2 + $0x10] sm:$0xf]
      %v394 = vld [vmem:[%s2 + $0x14] sm:$0xf]
      %v395 = vld [vmem:[%s2 + $0x18] sm:$0xf]
      %v396 = vld [vmem:[%s2 + $0x1c] sm:$0xf]
      %v397 = vld [vmem:[%s2 + $0x20] sm:$0xf]
      %v398 = vld [vmem:[%s2 + $0x24] sm:$0xf]
      %v399 = vld [vmem:[%s2 + $0x28] sm:$0xf]
      %v400 = vld [vmem:[%s2 + $0x2c] sm:$0xf]
      %v401 = vld [vmem:[%s2 + $0x30] sm:$0xf]
      %v402 = vld [vmem:[%s2 + $0x34] sm:$0xf]
      %v403 = vld [vmem:[%s2 + $0x38] sm:$0xf]
      %v404 = vld [vmem:[%s2 + $0x3c] sm:$0xf]
      %v405 = vld [vmem:[%s306] sm:$0xf]
      %v406 = vld [vmem:[%s306 + $0x4] sm:$0xf]
      %v407 = vld [vmem:[%s306 + $0x8] sm:$0xf]
      %v408 = vld [vmem:[%s306 + $0xc] sm:$0xf]
      %v409 = vld [vmem:[%s306 + $0x10] sm:$0xf]
      %v410 = vld [vmem:[%s306 + $0x14] sm:$0xf]
      %v411 = vld [vmem:[%s306 + $0x18] sm:$0xf]
      %v412 = vld [vmem:[%s306 + $0x1c] sm:$0xf]
      %v413 = vld [vmem:[%s306 + $0x20] sm:$0xf]
      %v414 = vld [vmem:[%s306 + $0x24] sm:$0xf]
      %v415 = vld [vmem:[%s306 + $0x28] sm:$0xf]
      %v416 = vld [vmem:[%s306 + $0x2c] sm:$0xf]
      %v417 = vld [vmem:[%s306 + $0x30] sm:$0xf]
      %v418 = vld [vmem:[%s306 + $0x34] sm:$0xf]
      %v419 = vld [vmem:[%s306 + $0x38] sm:$0xf]
      %v420 = vld [vmem:[%s306 + $0x3c] sm:$0xf]
      %v437 = vunpack.c.l.b16 %v389
      %v438 = vunpack.c.l.b16 %v390
      %v439 = vunpack.c.l.b16 %v391
      %v440 = vunpack.c.l.b16 %v392
      %v441 = vunpack.c.l.b16 %v393
      %v442 = vunpack.c.l.b16 %v394
      %v443 = vunpack.c.l.b16 %v395
      %v444 = vunpack.c.l.b16 %v396
      %v445 = vunpack.c.l.b16 %v397
      %v446 = vunpack.c.l.b16 %v398
      %v447 = vunpack.c.l.b16 %v399
      %v448 = vunpack.c.l.b16 %v400
      %v449 = vunpack.c.l.b16 %v401
      %v450 = vunpack.c.l.b16 %v402
      %v451 = vunpack.c.l.b16 %v403
      %v452 = vunpack.c.l.b16 %v404
      %v453 = vpack.c.b16 %v438, %v437
      %v454 = vpack.c.b16 %v440, %v439
      %v455 = vpack.c.b16 %v442, %v441
      %v456 = vpack.c.b16 %v444, %v443
      %v457 = vpack.c.b16 %v446, %v445
      %v458 = vpack.c.b16 %v448, %v447
      %v459 = vpack.c.b16 %v450, %v449
      %v460 = vpack.c.b16 %v452, %v451
      %v485 = vunpack.c.l.b16 %v405
      %v486 = vunpack.c.l.b16 %v406
      %v487 = vunpack.c.l.b16 %v407
      %v488 = vunpack.c.l.b16 %v408
      %v489 = vunpack.c.l.b16 %v409
      %v490 = vunpack.c.l.b16 %v410
      %v491 = vunpack.c.l.b16 %v411
      %v492 = vunpack.c.l.b16 %v412
      %v493 = vunpack.c.l.b16 %v413
      %v494 = vunpack.c.l.b16 %v414
      %v495 = vunpack.c.l.b16 %v415
      %v496 = vunpack.c.l.b16 %v416
      %v497 = vunpack.c.l.b16 %v417
      %v498 = vunpack.c.l.b16 %v418
      %v499 = vunpack.c.l.b16 %v419
      %v500 = vunpack.c.l.b16 %v420
      %v501 = vpack.c.b16 %v486, %v485
      %v502 = vpack.c.b16 %v488, %v487
      %v503 = vpack.c.b16 %v490, %v489
      %v504 = vpack.c.b16 %v492, %v491
      %v505 = vpack.c.b16 %v494, %v493
      %v506 = vpack.c.b16 %v496, %v495
      %v507 = vpack.c.b16 %v498, %v497
      %v508 = vpack.c.b16 %v500, %v499
      %517 = vmatpush.bf16.msra.mxu0 %v508
      %518 = vmatpush.bf16.msra.mxu0 %v507
      %519 = vmatpush.bf16.msra.mxu0 %v506
      %520 = vmatpush.bf16.msra.mxu0 %v505
      %521 = vmatpush.bf16.msra.mxu0 %v504
      %522 = vmatpush.bf16.msra.mxu0 %v503
      %523 = vmatpush.bf16.msra.mxu0 %v502
      %524 = vmatpush.bf16.msra.mxu0 %v501
      %525 = vmatmul.bf16.gmra.mxu0 %v453
      %v526 = vpop.f32.mrf.mxu0
      %v527 = vadd.f32 0.0, %v526
      %v528 = vpop.f32.mrf.mxu0
      %v529 = vadd.f32 0.0, %v528
      %530 = vmatmul.bf16.gmra.mxu0 %v454
      %v531 = vpop.f32.mrf.mxu0
      %v532 = vadd.f32 0.0, %v531
      %v533 = vpop.f32.mrf.mxu0
      %v534 = vadd.f32 0.0, %v533
      %535 = vmatmul.bf16.gmra.mxu0 %v455
      %v536 = vpop.f32.mrf.mxu0
      %v537 = vadd.f32 0.0, %v536
      %v538 = vpop.f32.mrf.mxu0
      %v539 = vadd.f32 0.0, %v538
      %540 = vmatmul.bf16.gmra.mxu0 %v456
      %v541 = vpop.f32.mrf.mxu0
      %v542 = vadd.f32 0.0, %v541
      %v543 = vpop.f32.mrf.mxu0
      %v544 = vadd.f32 0.0, %v543
      %545 = vmatmul.bf16.gmra.mxu0 %v457
      %v546 = vpop.f32.mrf.mxu0
      %v547 = vadd.f32 0.0, %v546
      %v548 = vpop.f32.mrf.mxu0
      %v549 = vadd.f32 0.0, %v548
      %550 = vmatmul.bf16.gmra.mxu0 %v458
      %v551 = vpop.f32.mrf.mxu0
      %v552 = vadd.f32 0.0, %v551
      %v553 = vpop.f32.mrf.mxu0
      %v554 = vadd.f32 0.0, %v553
      %555 = vmatmul.bf16.gmra.mxu0 %v459
      %v556 = vpop.f32.mrf.mxu0
      %v557 = vadd.f32 0.0, %v556
      %v558 = vpop.f32.mrf.mxu0
      %v559 = vadd.f32 0.0, %v558
      %560 = vmatmul.bf16.gmra.mxu0 %v460
      %v561 = vpop.f32.mrf.mxu0
      %v562 = vadd.f32 0.0, %v561
      %v563 = vpop.f32.mrf.mxu0
      %v564 = vadd.f32 0.0, %v563
      %565 = vdwg.mxu0
      %v582 = vunpack.c.l.b16 %v373
      %v583 = vunpack.c.l.b16 %v374
      %v584 = vunpack.c.l.b16 %v375
      %v585 = vunpack.c.l.b16 %v376
      %v586 = vunpack.c.l.b16 %v377
      %v587 = vunpack.c.l.b16 %v378
      %v588 = vunpack.c.l.b16 %v379
      %v589 = vunpack.c.l.b16 %v380
      %v590 = vunpack.c.l.b16 %v381
      %v591 = vunpack.c.l.b16 %v382
      %v592 = vunpack.c.l.b16 %v383
      %v593 = vunpack.c.l.b16 %v384
      %v594 = vunpack.c.l.b16 %v385
      %v595 = vunpack.c.l.b16 %v386
      %v596 = vunpack.c.l.b16 %v387
      %v597 = vunpack.c.l.b16 %v388
      %v598 = vpack.c.b16 %v583, %v582
      %v599 = vpack.c.b16 %v585, %v584
      %v600 = vpack.c.b16 %v587, %v586
      %v601 = vpack.c.b16 %v589, %v588
      %v602 = vpack.c.b16 %v591, %v590
      %v603 = vpack.c.b16 %v593, %v592
      %v604 = vpack.c.b16 %v595, %v594
      %v605 = vpack.c.b16 %v597, %v596
      %v630 = vunpack.c.l.b16 %v357
      %v631 = vunpack.c.l.b16 %v358
      %v632 = vunpack.c.l.b16 %v359
      %v633 = vunpack.c.l.b16 %v360
      %v634 = vunpack.c.l.b16 %v361
      %v635 = vunpack.c.l.b16 %v362
      %v636 = vunpack.c.l.b16 %v363
      %v637 = vunpack.c.l.b16 %v364
      %v638 = vunpack.c.l.b16 %v365
      %v639 = vunpack.c.l.b16 %v366
      %v640 = vunpack.c.l.b16 %v367
      %v641 = vunpack.c.l.b16 %v368
      %v642 = vunpack.c.l.b16 %v369
      %v643 = vunpack.c.l.b16 %v370
      %v644 = vunpack.c.l.b16 %v371
      %v645 = vunpack.c.l.b16 %v372
      %v646 = vpack.c.b16 %v631, %v630
      %v647 = vpack.c.b16 %v633, %v632
      %v648 = vpack.c.b16 %v635, %v634
      %v649 = vpack.c.b16 %v637, %v636
      %v650 = vpack.c.b16 %v639, %v638
      %v651 = vpack.c.b16 %v641, %v640
      %v652 = vpack.c.b16 %v643, %v642
      %v653 = vpack.c.b16 %v645, %v644
      %662 = vmatpush.bf16.msra.mxu0 %v653
      %663 = vmatpush.bf16.msra.mxu0 %v652
      %664 = vmatpush.bf16.msra.mxu0 %v651
      %665 = vmatpush.bf16.msra.mxu0 %v650
      %666 = vmatpush.bf16.msra.mxu0 %v649
      %667 = vmatpush.bf16.msra.mxu0 %v648
      %668 = vmatpush.bf16.msra.mxu0 %v647
      %669 = vmatpush.bf16.msra.mxu0 %v646
      %670 = vmatmul.bf16.gmra.mxu0 %v598
      %v671 = vpop.f32.mrf.mxu0
      %v672 = vadd.f32 %v527, %v671
      %v673 = vpop.f32.mrf.mxu0
      %v674 = vadd.f32 %v529, %v673
      %675 = vmatmul.bf16.gmra.mxu0 %v599
      %v676 = vpop.f32.mrf.mxu0
      %v677 = vadd.f32 %v532, %v676
      %v678 = vpop.f32.mrf.mxu0
      %v679 = vadd.f32 %v534, %v678
      %680 = vmatmul.bf16.gmra.mxu0 %v600
      %v681 = vpop.f32.mrf.mxu0
      %v682 = vadd.f32 %v537, %v681
      %v683 = vpop.f32.mrf.mxu0
      %v684 = vadd.f32 %v539, %v683
      %685 = vmatmul.bf16.gmra.mxu0 %v601
      %v686 = vpop.f32.mrf.mxu0
      %v687 = vadd.f32 %v542, %v686
      %v688 = vpop.f32.mrf.mxu0
      %v689 = vadd.f32 %v544, %v688
      %690 = vmatmul.bf16.gmra.mxu0 %v602
      %v691 = vpop.f32.mrf.mxu0
      %v692 = vadd.f32 %v547, %v691
      %v693 = vpop.f32.mrf.mxu0
      %v694 = vadd.f32 %v549, %v693
      %695 = vmatmul.bf16.gmra.mxu0 %v603
      %v696 = vpop.f32.mrf.mxu0
      %v697 = vadd.f32 %v552, %v696
      %v698 = vpop.f32.mrf.mxu0
      %v699 = vadd.f32 %v554, %v698
      %700 = vmatmul.bf16.gmra.mxu0 %v604
      %v701 = vpop.f32.mrf.mxu0
      %v702 = vadd.f32 %v557, %v701
      %v703 = vpop.f32.mrf.mxu0
      %v704 = vadd.f32 %v559, %v703
      %705 = vmatmul.bf16.gmra.mxu0 %v605
      %v706 = vpop.f32.mrf.mxu0
      %v707 = vadd.f32 %v562, %v706
      %v708 = vpop.f32.mrf.mxu0
      %v709 = vadd.f32 %v564, %v708
      %710 = vdwg.mxu0
      %v711 = vld [vmem:[%s320] sm:$0xff]
      %v712 = vpack.c.bf16 %v674, %v672
      %v713 = vpack.c.bf16 %v679, %v677
      %v714 = vpack.c.bf16 %v684, %v682
      %v715 = vpack.c.bf16 %v689, %v687
      %v716 = vpack.c.bf16 %v694, %v692
      %v717 = vpack.c.bf16 %v699, %v697
      %v718 = vpack.c.bf16 %v704, %v702
      %v719 = vpack.c.bf16 %v709, %v707
      %v720 = vld [vmem:[%s311] sm:$0xf]
      %v721 = vld [vmem:[%s311 + $0x4] sm:$0xf]
      %v722 = vld [vmem:[%s311 + $0x8] sm:$0xf]
      %v723 = vld [vmem:[%s311 + $0xc] sm:$0xf]
      %v724 = vld [vmem:[%s311 + $0x10] sm:$0xf]
      %v725 = vld [vmem:[%s311 + $0x14] sm:$0xf]
      %v726 = vld [vmem:[%s311 + $0x18] sm:$0xf]
      %v727 = vld [vmem:[%s311 + $0x1c] sm:$0xf]
      %v728 = vld [vmem:[%s311 + $0x20] sm:$0xf]
      %v729 = vld [vmem:[%s311 + $0x24] sm:$0xf]
      %v730 = vld [vmem:[%s311 + $0x28] sm:$0xf]
      %v731 = vld [vmem:[%s311 + $0x2c] sm:$0xf]
      %v732 = vld [vmem:[%s311 + $0x30] sm:$0xf]
      %v733 = vld [vmem:[%s311 + $0x34] sm:$0xf]
      %v734 = vld [vmem:[%s311 + $0x38] sm:$0xf]
      %v735 = vld [vmem:[%s311 + $0x3c] sm:$0xf]
      %v736 = vperm.slane %v711, 0
      %v753 = vunpack.c.l.b16 %v720
      %v754 = vunpack.c.l.b16 %v721
      %v755 = vunpack.c.l.b16 %v722
      %v756 = vunpack.c.l.b16 %v723
      %v757 = vunpack.c.l.b16 %v724
      %v758 = vunpack.c.l.b16 %v725
      %v759 = vunpack.c.l.b16 %v726
      %v760 = vunpack.c.l.b16 %v727
      %v761 = vunpack.c.l.b16 %v728
      %v762 = vunpack.c.l.b16 %v729
      %v763 = vunpack.c.l.b16 %v730
      %v764 = vunpack.c.l.b16 %v731
      %v765 = vunpack.c.l.b16 %v732
      %v766 = vunpack.c.l.b16 %v733
      %v767 = vunpack.c.l.b16 %v734
      %v768 = vunpack.c.l.b16 %v735
      %v769 = vpack.c.b16 %v754, %v753
      %v770 = vpack.c.b16 %v756, %v755
      %v771 = vpack.c.b16 %v758, %v757
      %v772 = vpack.c.b16 %v760, %v759
      %v773 = vpack.c.b16 %v762, %v761
      %v774 = vpack.c.b16 %v764, %v763
      %v775 = vpack.c.b16 %v766, %v765
      %v776 = vpack.c.b16 %v768, %v767
      %785 = vmatpush.bf16.msra.mxu0 %v776
      %786 = vmatpush.bf16.msra.mxu0 %v775
      %787 = vmatpush.bf16.msra.mxu0 %v774
      %788 = vmatpush.bf16.msra.mxu0 %v773
      %789 = vmatpush.bf16.msra.mxu0 %v772
      %790 = vmatpush.bf16.msra.mxu0 %v771
      %791 = vmatpush.bf16.msra.mxu0 %v770
      %792 = vmatpush.bf16.msra.mxu0 %v769
      %793 = vmatmul.bf16.gmra.mxu0 %v712
      %v794 = vpop.f32.mrf.mxu0
      %v795 = vadd.f32 %v736, %v794
      %v796 = vpop.f32.mrf.mxu0
      %v797 = vadd.f32 %v736, %v796
      %798 = vmatmul.bf16.gmra.mxu0 %v713
      %v799 = vpop.f32.mrf.mxu0
      %v800 = vadd.f32 %v736, %v799
      %v801 = vpop.f32.mrf.mxu0
      %v802 = vadd.f32 %v736, %v801
      %803 = vmatmul.bf16.gmra.mxu0 %v714
      %v804 = vpop.f32.mrf.mxu0
      %v805 = vadd.f32 %v736, %v804
      %v806 = vpop.f32.mrf.mxu0
      %v807 = vadd.f32 %v736, %v806
      %808 = vmatmul.bf16.gmra.mxu0 %v715
      %v809 = vpop.f32.mrf.mxu0
      %v810 = vadd.f32 %v736, %v809
      %v811 = vpop.f32.mrf.mxu0
      %v812 = vadd.f32 %v736, %v811
      %813 = vmatmul.bf16.gmra.mxu0 %v716
      %v814 = vpop.f32.mrf.mxu0
      %v815 = vadd.f32 %v736, %v814
      %v816 = vpop.f32.mrf.mxu0
      %v817 = vadd.f32 %v736, %v816
      %818 = vmatmul.bf16.gmra.mxu0 %v717
      %v819 = vpop.f32.mrf.mxu0
      %v820 = vadd.f32 %v736, %v819
      %v821 = vpop.f32.mrf.mxu0
      %v822 = vadd.f32 %v736, %v821
      %823 = vmatmul.bf16.gmra.mxu0 %v718
      %v824 = vpop.f32.mrf.mxu0
      %v825 = vadd.f32 %v736, %v824
      %v826 = vpop.f32.mrf.mxu0
      %v827 = vadd.f32 %v736, %v826
      %828 = vmatmul.bf16.gmra.mxu0 %v719
      %v829 = vpop.f32.mrf.mxu0
      %v830 = vadd.f32 %v736, %v829
      %v831 = vpop.f32.mrf.mxu0
      %v832 = vadd.f32 %v736, %v831
      %833 = vdwg.mxu0
      %v834 = vmax.f32 %v795, 0.0
      %v835 = vmax.f32 %v797, 0.0
      %v836 = vmax.f32 %v800, 0.0
      %v837 = vmax.f32 %v802, 0.0
      %v838 = vmax.f32 %v805, 0.0
      %v839 = vmax.f32 %v807, 0.0
      %v840 = vmax.f32 %v810, 0.0
      %v841 = vmax.f32 %v812, 0.0
      %v842 = vmax.f32 %v815, 0.0
      %v843 = vmax.f32 %v817, 0.0
      %v844 = vmax.f32 %v820, 0.0
      %v845 = vmax.f32 %v822, 0.0
      %v846 = vmax.f32 %v825, 0.0
      %v847 = vmax.f32 %v827, 0.0
      %v848 = vmax.f32 %v830, 0.0
      %v849 = vmax.f32 %v832, 0.0
      %v850 = vpack.c.bf16 %v835, %v834
      %v851 = vpack.c.bf16 %v837, %v836
      %v852 = vpack.c.bf16 %v839, %v838
      %v853 = vpack.c.bf16 %v841, %v840
      %v854 = vpack.c.bf16 %v843, %v842
      %v855 = vpack.c.bf16 %v845, %v844
      %v856 = vpack.c.bf16 %v847, %v846
      %v857 = vpack.c.bf16 %v849, %v848
      %v858 = vld [vmem:[%s316] sm:$0xf]
      %v859 = vld [vmem:[%s316 + $0x4] sm:$0xf]
      %v860 = vld [vmem:[%s316 + $0x8] sm:$0xf]
      %v861 = vld [vmem:[%s316 + $0xc] sm:$0xf]
      %v862 = vld [vmem:[%s316 + $0x10] sm:$0xf]
      %v863 = vld [vmem:[%s316 + $0x14] sm:$0xf]
      %v864 = vld [vmem:[%s316 + $0x18] sm:$0xf]
      %v865 = vld [vmem:[%s316 + $0x1c] sm:$0xf]
      %v866 = vld [vmem:[%s316 + $0x20] sm:$0xf]
      %v867 = vld [vmem:[%s316 + $0x24] sm:$0xf]
      %v868 = vld [vmem:[%s316 + $0x28] sm:$0xf]
      %v869 = vld [vmem:[%s316 + $0x2c] sm:$0xf]
      %v870 = vld [vmem:[%s316 + $0x30] sm:$0xf]
      %v871 = vld [vmem:[%s316 + $0x34] sm:$0xf]
      %v872 = vld [vmem:[%s316 + $0x38] sm:$0xf]
      %v873 = vld [vmem:[%s316 + $0x3c] sm:$0xf]
      %v874 = vperm.slane %v711, 1
      %v891 = vunpack.c.l.b16 %v858
      %v892 = vunpack.c.l.b16 %v859
      %v893 = vunpack.c.l.b16 %v860
      %v894 = vunpack.c.l.b16 %v861
      %v895 = vunpack.c.l.b16 %v862
      %v896 = vunpack.c.l.b16 %v863
      %v897 = vunpack.c.l.b16 %v864
      %v898 = vunpack.c.l.b16 %v865
      %v899 = vunpack.c.l.b16 %v866
      %v900 = vunpack.c.l.b16 %v867
      %v901 = vunpack.c.l.b16 %v868
      %v902 = vunpack.c.l.b16 %v869
      %v903 = vunpack.c.l.b16 %v870
      %v904 = vunpack.c.l.b16 %v871
      %v905 = vunpack.c.l.b16 %v872
      %v906 = vunpack.c.l.b16 %v873
      %v907 = vpack.c.b16 %v892, %v891
      %v908 = vpack.c.b16 %v894, %v893
      %v909 = vpack.c.b16 %v896, %v895
      %v910 = vpack.c.b16 %v898, %v897
      %v911 = vpack.c.b16 %v900, %v899
      %v912 = vpack.c.b16 %v902, %v901
      %v913 = vpack.c.b16 %v904, %v903
      %v914 = vpack.c.b16 %v906, %v905
      %923 = vmatpush.bf16.msra.mxu0 %v914
      %924 = vmatpush.bf16.msra.mxu0 %v913
      %925 = vmatpush.bf16.msra.mxu0 %v912
      %926 = vmatpush.bf16.msra.mxu0 %v911
      %927 = vmatpush.bf16.msra.mxu0 %v910
      %928 = vmatpush.bf16.msra.mxu0 %v909
      %929 = vmatpush.bf16.msra.mxu0 %v908
      %930 = vmatpush.bf16.msra.mxu0 %v907
      %931 = vmatmul.bf16.gmra.mxu0 %v850
      %v932 = vpop.f32.mrf.mxu0
      %v933 = vadd.f32 %v874, %v932
      %v934 = vpop.f32.mrf.mxu0
      %v935 = vadd.f32 %v874, %v934
      %936 = vmatmul.bf16.gmra.mxu0 %v851
      %v937 = vpop.f32.mrf.mxu0
      %v938 = vadd.f32 %v874, %v937
      %v939 = vpop.f32.mrf.mxu0
      %v940 = vadd.f32 %v874, %v939
      %941 = vmatmul.bf16.gmra.mxu0 %v852
      %v942 = vpop.f32.mrf.mxu0
      %v943 = vadd.f32 %v874, %v942
      %v944 = vpop.f32.mrf.mxu0
      %v945 = vadd.f32 %v874, %v944
      %946 = vmatmul.bf16.gmra.mxu0 %v853
      %v947 = vpop.f32.mrf.mxu0
      %v948 = vadd.f32 %v874, %v947
      %v949 = vpop.f32.mrf.mxu0
      %v950 = vadd.f32 %v874, %v949
      %951 = vmatmul.bf16.gmra.mxu0 %v854
      %v952 = vpop.f32.mrf.mxu0
      %v953 = vadd.f32 %v874, %v952
      %v954 = vpop.f32.mrf.mxu0
      %v955 = vadd.f32 %v874, %v954
      %956 = vmatmul.bf16.gmra.mxu0 %v855
      %v957 = vpop.f32.mrf.mxu0
      %v958 = vadd.f32 %v874, %v957
      %v959 = vpop.f32.mrf.mxu0
      %v960 = vadd.f32 %v874, %v959
      %961 = vmatmul.bf16.gmra.mxu0 %v856
      %v962 = vpop.f32.mrf.mxu0
      %v963 = vadd.f32 %v874, %v962
      %v964 = vpop.f32.mrf.mxu0
      %v965 = vadd.f32 %v874, %v964
      %966 = vmatmul.bf16.gmra.mxu0 %v857
      %v967 = vpop.f32.mrf.mxu0
      %v968 = vadd.f32 %v874, %v967
      %v969 = vpop.f32.mrf.mxu0
      %v970 = vadd.f32 %v874, %v969
      %971 = vdwg.mxu0
      %v972 = vlaneseq
      %v973 = vshrl.u32 %v972, 7
      %v974 = vadd.s32 %v973, 8
      %v975 = vadd.s32 %v973, 16
      %v976 = vadd.s32 %v973, 24
      %v977 = vadd.s32 %v973, 32
      %v978 = vadd.s32 %v973, 40
      %v979 = vadd.s32 %v973, 48
      %v980 = vadd.s32 %v973, 56
      %v981 = vadd.s32 %v973, 64
      %v982 = vadd.s32 %v973, 72
      %v983 = vadd.s32 %v973, 80
      %v984 = vadd.s32 %v973, 88
      %v985 = vadd.s32 %v973, 96
      %v986 = vadd.s32 %v973, 104
      %v987 = vadd.s32 %v973, 112
      %v988 = vadd.s32 %v973, 120
      %vm989 = vcmp.lt.s32.totalorder %v973, 16
      %vm990 = vcmp.lt.s32.totalorder %v974, 16
      %vm991 = vcmp.lt.s32.totalorder %v975, 16
      %vm992 = vcmp.lt.s32.totalorder %v976, 16
      %vm993 = vcmp.lt.s32.totalorder %v977, 16
      %vm994 = vcmp.lt.s32.totalorder %v978, 16
      %vm995 = vcmp.lt.s32.totalorder %v979, 16
      %vm996 = vcmp.lt.s32.totalorder %v980, 16
      %vm997 = vcmp.lt.s32.totalorder %v981, 16
      %vm998 = vcmp.lt.s32.totalorder %v982, 16
      %vm999 = vcmp.lt.s32.totalorder %v983, 16
      %vm1000 = vcmp.lt.s32.totalorder %v984, 16
      %vm1001 = vcmp.lt.s32.totalorder %v985, 16
      %vm1002 = vcmp.lt.s32.totalorder %v986, 16
      %vm1003 = vcmp.lt.s32.totalorder %v987, 16
      %vm1004 = vcmp.lt.s32.totalorder %v988, 16
      %v1005 = vsel %vm989, 0.0625, 0.0
      %v1006 = vsel %vm990, 0.0625, 0.0
      %v1007 = vsel %vm991, 0.0625, 0.0
      %v1008 = vsel %vm992, 0.0625, 0.0
      %v1009 = vsel %vm993, 0.0625, 0.0
      %v1010 = vsel %vm994, 0.0625, 0.0
      %v1011 = vsel %vm995, 0.0625, 0.0
      %v1012 = vsel %vm996, 0.0625, 0.0
      %v1013 = vsel %vm997, 0.0625, 0.0
      %v1014 = vsel %vm998, 0.0625, 0.0
      %v1015 = vsel %vm999, 0.0625, 0.0
      %v1016 = vsel %vm1000, 0.0625, 0.0
      %v1017 = vsel %vm1001, 0.0625, 0.0
      %v1018 = vsel %vm1002, 0.0625, 0.0
      %v1019 = vsel %vm1003, 0.0625, 0.0
      %v1020 = vsel %vm1004, 0.0625, 0.0
      %v1021 = vmul.f32 %v933, %v1005
      %v1022 = vmul.f32 %v935, %v1006
      %v1023 = vmul.f32 %v938, %v1007
      %v1024 = vmul.f32 %v940, %v1008
      %v1025 = vmul.f32 %v943, %v1009
      %v1026 = vmul.f32 %v945, %v1010
      %v1027 = vmul.f32 %v948, %v1011
      %v1028 = vmul.f32 %v950, %v1012
      %v1029 = vmul.f32 %v953, %v1013
      %v1030 = vmul.f32 %v955, %v1014
      %v1031 = vmul.f32 %v958, %v1015
      %v1032 = vmul.f32 %v960, %v1016
      %v1033 = vmul.f32 %v963, %v1017
      %v1034 = vmul.f32 %v965, %v1018
      %v1035 = vmul.f32 %v968, %v1019
      %v1036 = vmul.f32 %v970, %v1020
      %v1037 = vadd.f32 %v1021, %v1022
      %v1038 = vadd.f32 %v1037, %v1023
      %v1039 = vadd.f32 %v1038, %v1024
      %v1040 = vadd.f32 %v1039, %v1025
      %v1041 = vadd.f32 %v1040, %v1026
      %v1042 = vadd.f32 %v1041, %v1027
      %v1043 = vadd.f32 %v1042, %v1028
      %v1044 = vadd.f32 %v1043, %v1029
      %v1045 = vadd.f32 %v1044, %v1030
      %v1046 = vadd.f32 %v1045, %v1031
      %v1047 = vadd.f32 %v1046, %v1032
      %v1048 = vadd.f32 %v1047, %v1033
      %v1049 = vadd.f32 %v1048, %v1034
      %v1050 = vadd.f32 %v1049, %v1035
      %v1051 = vadd.f32 %v1050, %v1036
      %v1052 = vrot.slane %v1051, 4
      %v1053 = vadd.f32 %v1051, %v1052
      %v1054 = vrot.slane %v1053, 2
      %v1055 = vadd.f32 %v1053, %v1054
      %v1056 = vrot.slane %v1055, 1
      %v1057 = vadd.f32 %v1055, %v1056
      %v1058 = vmul.f32 %v1021, %v933
      %v1059 = vmul.f32 %v1022, %v935
      %v1060 = vmul.f32 %v1023, %v938
      %v1061 = vmul.f32 %v1024, %v940
      %v1062 = vmul.f32 %v1025, %v943
      %v1063 = vmul.f32 %v1026, %v945
      %v1064 = vmul.f32 %v1027, %v948
      %v1065 = vmul.f32 %v1028, %v950
      %v1066 = vmul.f32 %v1029, %v953
      %v1067 = vmul.f32 %v1030, %v955
      %v1068 = vmul.f32 %v1031, %v958
      %v1069 = vmul.f32 %v1032, %v960
      %v1070 = vmul.f32 %v1033, %v963
      %v1071 = vmul.f32 %v1034, %v965
      %v1072 = vmul.f32 %v1035, %v968
      %v1073 = vmul.f32 %v1036, %v970
      %v1074 = vadd.f32 %v1058, %v1059
      %v1075 = vadd.f32 %v1074, %v1060
      %v1076 = vadd.f32 %v1075, %v1061
      %v1077 = vadd.f32 %v1076, %v1062
      %v1078 = vadd.f32 %v1077, %v1063
      %v1079 = vadd.f32 %v1078, %v1064
      %v1080 = vadd.f32 %v1079, %v1065
      %v1081 = vadd.f32 %v1080, %v1066
      %v1082 = vadd.f32 %v1081, %v1067
      %v1083 = vadd.f32 %v1082, %v1068
      %v1084 = vadd.f32 %v1083, %v1069
      %v1085 = vadd.f32 %v1084, %v1070
      %v1086 = vadd.f32 %v1085, %v1071
      %v1087 = vadd.f32 %v1086, %v1072
      %v1088 = vadd.f32 %v1087, %v1073
      %v1089 = vrot.slane %v1088, 4
      %v1090 = vadd.f32 %v1088, %v1089
      %v1091 = vrot.slane %v1090, 2
      %v1092 = vadd.f32 %v1090, %v1091
      %v1093 = vrot.slane %v1092, 1
      %v1094 = vadd.f32 %v1092, %v1093
      %v1095 = vmul.f32 %v1057, %v1057
      %v1096 = vsub.f32 %v1094, %v1095
      %v1097 = vmax.f32 %v1096, 0.0
      %v1098 = vadd.f32 %v1097, 1e-05
      %v1099 = vrsqrt.pop %v1098
      %v1100 = vmul.f32 %v1099, %v1098
      %v1101 = vmul.f32 %v1100, %v1099
      %v1102 = vmul.f32 0.5, %v1101
      %v1103 = vsub.f32 1.5, %v1102
      %v1104 = vmul.f32 %v1099, %v1103
      %vm1105 = vweird.f32 %v1098
      %vm1106 = vweird.f32 %v1099
      %vm1107 = vmor %vm1105, %vm1106
      %v1108 = vsel %vm1107, %v1099, %v1104
      %v1109 = vmul.f32 %v711, %v1108
      %v1110 = vsub.f32 %v933, %v1057
      %v1111 = vsub.f32 %v935, %v1057
      %v1112 = vsub.f32 %v938, %v1057
      %v1113 = vsub.f32 %v940, %v1057
      %v1114 = vsub.f32 %v943, %v1057
      %v1115 = vsub.f32 %v945, %v1057
      %v1116 = vsub.f32 %v948, %v1057
      %v1117 = vsub.f32 %v950, %v1057
      %v1118 = vsub.f32 %v953, %v1057
      %v1119 = vsub.f32 %v955, %v1057
      %v1120 = vsub.f32 %v958, %v1057
      %v1121 = vsub.f32 %v960, %v1057
      %v1122 = vsub.f32 %v963, %v1057
      %v1123 = vsub.f32 %v965, %v1057
      %v1124 = vsub.f32 %v968, %v1057
      %v1125 = vsub.f32 %v970, %v1057
      %v1126 = vperm.slane %v1109, 2
      %v1127 = vmul.f32 %v1110, %v1126
      %v1128 = vmul.f32 %v1111, %v1126
      %v1129 = vmul.f32 %v1112, %v1126
      %v1130 = vmul.f32 %v1113, %v1126
      %v1131 = vmul.f32 %v1114, %v1126
      %v1132 = vmul.f32 %v1115, %v1126
      %v1133 = vmul.f32 %v1116, %v1126
      %v1134 = vmul.f32 %v1117, %v1126
      %v1135 = vmul.f32 %v1118, %v1126
      %v1136 = vmul.f32 %v1119, %v1126
      %v1137 = vmul.f32 %v1120, %v1126
      %v1138 = vmul.f32 %v1121, %v1126
      %v1139 = vmul.f32 %v1122, %v1126
      %v1140 = vmul.f32 %v1123, %v1126
      %v1141 = vmul.f32 %v1124, %v1126
      %v1142 = vmul.f32 %v1125, %v1126
      %v1143 = vperm.slane %v711, 3
      %v1144 = vadd.f32 %v1127, %v1143
      %v1145 = vadd.f32 %v1128, %v1143
      %v1146 = vadd.f32 %v1129, %v1143
      %v1147 = vadd.f32 %v1130, %v1143
      %v1148 = vadd.f32 %v1131, %v1143
      %v1149 = vadd.f32 %v1132, %v1143
      %v1150 = vadd.f32 %v1133, %v1143
      %v1151 = vadd.f32 %v1134, %v1143
      %v1152 = vadd.f32 %v1135, %v1143
      %v1153 = vadd.f32 %v1136, %v1143
      %v1154 = vadd.f32 %v1137, %v1143
      %v1155 = vadd.f32 %v1138, %v1143
      %v1156 = vadd.f32 %v1139, %v1143
      %v1157 = vadd.f32 %v1140, %v1143
      %v1158 = vadd.f32 %v1141, %v1143
      %v1159 = vadd.f32 %v1142, %v1143
      %p1160 = scmp.lt.s32.totalorder %s18, 4
      // Predicated region
      $region53: #{ginet_forward.2} parent=47 // pred_check
        %p1161 = pneg %p1160
      $region54: #{ginet_forward.2} parent=47 // pred_check_branch
        %1163 = sbr.rel (%p1161) target = $region56
      $region55: #{ginet_forward.2} parent=47 // pred_region
        %v1164 = vmax.f32 %v1144, 0.0
        %v1165 = vmax.f32 %v1145, 0.0
        %v1166 = vmax.f32 %v1146, 0.0
        %v1167 = vmax.f32 %v1147, 0.0
        %v1168 = vmax.f32 %v1148, 0.0
        %v1169 = vmax.f32 %v1149, 0.0
        %v1170 = vmax.f32 %v1150, 0.0
        %v1171 = vmax.f32 %v1151, 0.0
        %v1172 = vmax.f32 %v1152, 0.0
        %v1173 = vmax.f32 %v1153, 0.0
        %v1174 = vmax.f32 %v1154, 0.0
        %v1175 = vmax.f32 %v1155, 0.0
        %v1176 = vmax.f32 %v1156, 0.0
        %v1177 = vmax.f32 %v1157, 0.0
        %v1178 = vmax.f32 %v1158, 0.0
        %v1179 = vmax.f32 %v1159, 0.0
        %v1180 = vpack.c.bf16 %v1164, %v1164
        %v1181 = vpack.c.bf16 %v1165, %v1165
        %v1182 = vpack.c.bf16 %v1166, %v1166
        %v1183 = vpack.c.bf16 %v1167, %v1167
        %v1184 = vpack.c.bf16 %v1168, %v1168
        %v1185 = vpack.c.bf16 %v1169, %v1169
        %v1186 = vpack.c.bf16 %v1170, %v1170
        %v1187 = vpack.c.bf16 %v1171, %v1171
        %v1188 = vpack.c.bf16 %v1172, %v1172
        %v1189 = vpack.c.bf16 %v1173, %v1173
        %v1190 = vpack.c.bf16 %v1174, %v1174
        %v1191 = vpack.c.bf16 %v1175, %v1175
        %v1192 = vpack.c.bf16 %v1176, %v1176
        %v1193 = vpack.c.bf16 %v1177, %v1177
        %v1194 = vpack.c.bf16 %v1178, %v1178
        %v1195 = vpack.c.bf16 %v1179, %v1179
        %1196 = vst [vmem:[#allocation2] sm:$0xf] %v1180
        %1197 = vst [vmem:[#allocation2 + $0x4] sm:$0xf] %v1181
        %1198 = vst [vmem:[#allocation2 + $0x8] sm:$0xf] %v1182
        %1199 = vst [vmem:[#allocation2 + $0xc] sm:$0xf] %v1183
        %1200 = vst [vmem:[#allocation2 + $0x10] sm:$0xf] %v1184
        %1201 = vst [vmem:[#allocation2 + $0x14] sm:$0xf] %v1185
        %1202 = vst [vmem:[#allocation2 + $0x18] sm:$0xf] %v1186
        %1203 = vst [vmem:[#allocation2 + $0x1c] sm:$0xf] %v1187
        %1204 = vst [vmem:[#allocation2 + $0x20] sm:$0xf] %v1188
        %1205 = vst [vmem:[#allocation2 + $0x24] sm:$0xf] %v1189
        %1206 = vst [vmem:[#allocation2 + $0x28] sm:$0xf] %v1190
        %1207 = vst [vmem:[#allocation2 + $0x2c] sm:$0xf] %v1191
        %1208 = vst [vmem:[#allocation2 + $0x30] sm:$0xf] %v1192
        %1209 = vst [vmem:[#allocation2 + $0x34] sm:$0xf] %v1193
        %1210 = vst [vmem:[#allocation2 + $0x38] sm:$0xf] %v1194
        %1211 = vst [vmem:[#allocation2 + $0x3c] sm:$0xf] %v1195
      $region56: #{ginet_forward.2} parent=47 // pred_fallthru
        _
      %p1212 = scmp.eq.s32.totalorder %s18, 4
      // Predicated region
      $region57: #{ginet_forward.2} parent=47 // pred_check
        %p1213 = pneg %p1212
      $region58: #{ginet_forward.2} parent=47 // pred_check_branch
        %1215 = sbr.rel (%p1213) target = $region60
      $region59: #{ginet_forward.2} parent=47 // pred_region
        %v1216 = vpack.c.bf16 %v1144, %v1144
        %v1217 = vpack.c.bf16 %v1145, %v1145
        %v1218 = vpack.c.bf16 %v1146, %v1146
        %v1219 = vpack.c.bf16 %v1147, %v1147
        %v1220 = vpack.c.bf16 %v1148, %v1148
        %v1221 = vpack.c.bf16 %v1149, %v1149
        %v1222 = vpack.c.bf16 %v1150, %v1150
        %v1223 = vpack.c.bf16 %v1151, %v1151
        %v1224 = vpack.c.bf16 %v1152, %v1152
        %v1225 = vpack.c.bf16 %v1153, %v1153
        %v1226 = vpack.c.bf16 %v1154, %v1154
        %v1227 = vpack.c.bf16 %v1155, %v1155
        %v1228 = vpack.c.bf16 %v1156, %v1156
        %v1229 = vpack.c.bf16 %v1157, %v1157
        %v1230 = vpack.c.bf16 %v1158, %v1158
        %v1231 = vpack.c.bf16 %v1159, %v1159
        %1232 = vst [vmem:[%s7] sm:$0xf] %v1216
        %1233 = vst [vmem:[%s7 + $0x4] sm:$0xf] %v1217
        %1234 = vst [vmem:[%s7 + $0x8] sm:$0xf] %v1218
        %1235 = vst [vmem:[%s7 + $0xc] sm:$0xf] %v1219
        %1236 = vst [vmem:[%s7 + $0x10] sm:$0xf] %v1220
        %1237 = vst [vmem:[%s7 + $0x14] sm:$0xf] %v1221
        %1238 = vst [vmem:[%s7 + $0x18] sm:$0xf] %v1222
        %1239 = vst [vmem:[%s7 + $0x1c] sm:$0xf] %v1223
        %1240 = vst [vmem:[%s7 + $0x20] sm:$0xf] %v1224
        %1241 = vst [vmem:[%s7 + $0x24] sm:$0xf] %v1225
        %1242 = vst [vmem:[%s7 + $0x28] sm:$0xf] %v1226
        %1243 = vst [vmem:[%s7 + $0x2c] sm:$0xf] %v1227
        %1244 = vst [vmem:[%s7 + $0x30] sm:$0xf] %v1228
        %1245 = vst [vmem:[%s7 + $0x34] sm:$0xf] %v1229
        %1246 = vst [vmem:[%s7 + $0x38] sm:$0xf] %v1230
        %1247 = vst [vmem:[%s7 + $0x3c] sm:$0xf] %v1231
      $region60: #{ginet_forward.2} parent=47 // pred_fallthru
        _
      // Predicated region
      $region61: #{ginet_forward.2} parent=47 // pred_check
        %p1248 = pneg %p198
      $region62: #{ginet_forward.2} parent=47 // pred_check_branch
        %1250 = sbr.rel (%p1248) target = $region64
      $region63: #{ginet_forward.2} parent=47 // pred_region
        _
      $region64: #{ginet_forward.2} parent=47 // pred_fallthru
        _
      // Predicated region
      $region65: #{ginet_forward.2} parent=47 // pred_check
        %p1251 = pneg %p198
      $region66: #{ginet_forward.2} parent=47 // pred_check_branch
        %1253 = sbr.rel (%p1251) target = $region68
      $region67: #{ginet_forward.2} parent=47 // pred_region
        _
      $region68: #{ginet_forward.2} parent=47 // pred_fallthru
        _
    $region48: #{ginet_forward.2} parent=5 // pred_fallthru
      _
    %p1254 = scmp.le.s32.totalorder 2, %s13
    // Predicated region
    $region69: #{ginet_forward.2} parent=5 // pred_check
      %p1255 = pneg %p1254
    $region70: #{ginet_forward.2} parent=5 // pred_check_branch
      %1257 = sbr.rel (%p1255) target = $region72
    $region71: #{ginet_forward.2} parent=5 // pred_region
      %s1258 = ssub.s32 %s13, 2
    $region72: #{ginet_forward.2} parent=5 // pred_fallthru
      _
  $region6: #{ginet_forward.2} parent=0 // loop_footer
    %s17 = sadd.s32 1, %s13
  $region7: #{ginet_forward.2} parent=0 // loop_footer_branch
    %12 = sbr.rel target = $region3
  $region8: #{ginet_forward.2} parent=0 // loop_exit
    _

</llo_original>
